<compile_context>
chip_gen: v7x
topology: tpu7x:2x2x1
jax: 0.10.0
libtpu: 0.0.40
codegen_flags: <defaults>
</compile_context>

<pallas_src>
from functools import partial

import jax
import jax.numpy as jnp
from jax.experimental import pallas as pl
from jax.experimental.pallas import tpu as pltpu


def _round_up(x, m):
    return ((x + m - 1) // m) * m


def _make_energy_kernel(true_vocab, vocab_tile, vocab_pad, hidden):
    num_vocab_tiles = vocab_pad // vocab_tile
    has_pad = vocab_pad != true_vocab

    def kernel(embT_ref, maskT_ref, w1T_ref, w2T_ref, energy_ref, h_s, m_s, l_s, t_s):
        # embT_ref : (H_aug, TM) bf16  masked-row embeddings (+ ones row), rows on lanes
        # maskT_ref: (1, TM)    f32    attention mask for those rows (lane-dense)
        # w1T_ref  : (H_aug, H_aug) bf16  W1^T with b1 folded into column `hidden`
        # w2T_ref  : (TV, H_aug) bf16  vocab tile of W2^T with b2 folded into column `hidden`
        # energy_ref: (1, TM) f32      lane-dense per-row energies (written at last j)
        # scratch: h_s (H_aug,TM) bf16 cached hidden; m_s/l_s/t_s (1,TM) f32 online stats
        j = pl.program_id(1)

        @pl.when(j == 0)
        def _init():
            # hidden layer once per row tile; b1 arrives via W1^T's folded bias column
            pre = jnp.dot(w1T_ref[...], embT_ref[...],
                          preferred_element_type=jnp.float32)            # (H_aug, TM)
            h = jnp.tanh(pre) * maskT_ref[...]
            # force the augmented rows (sublane >= hidden) to 1 so W2^T's folded b2
            # column contributes regardless of the attention mask
            row = jax.lax.broadcasted_iota(jnp.int32, h.shape, 0)
            h = jnp.where(row >= hidden, 1.0, h)
            h_s[...] = h.astype(h_s.dtype)
            m_s[...] = jnp.full(m_s.shape, -1e30, jnp.float32)
            l_s[...] = jnp.zeros(l_s.shape, jnp.float32)
            t_s[...] = jnp.zeros(t_s.shape, jnp.float32)

        # vocab tile of logits^T: (TV, TM), f32 accumulation on the MXU (b2 folded in)
        logits = jnp.dot(w2T_ref[...], h_s[...],
                         preferred_element_type=jnp.float32)

        if has_pad:
            col = jax.lax.broadcasted_iota(jnp.int32, (vocab_tile, 1), 0)
            valid = (j * vocab_tile + col) < true_vocab                   # (TV, 1)
            logits_for_max = jnp.where(valid, logits, -jnp.inf)
        else:
            logits_for_max = logits

        # online (streaming) statistics along the vocab (sublane) axis:
        #   m: running max, l: running sum(exp(logits - m)), t: running sum(logits - m)
        m_prev = m_s[...]
        m_new = jnp.maximum(m_prev, jnp.max(logits_for_max, axis=0, keepdims=True))
        d = logits - m_new                       # single (TV,TM) subtraction pass, reused
        e = jnp.exp(d)
        if has_pad:
            e = jnp.where(valid, e, 0.0)
            d_for_sum = jnp.where(valid, d, 0.0)
        else:
            d_for_sum = d

        alpha = jnp.exp(m_prev - m_new)
        l_s[...] = alpha * l_s[...] + jnp.sum(e, axis=0, keepdims=True)
        # valid vocab entries already folded in; only the LAST tile can hold padding,
        # so all previously-seen tiles are full -> j * vocab_tile is exact.
        v_seen = (j * vocab_tile).astype(jnp.float32)
        t_s[...] = (t_s[...] - v_seen * (m_new - m_prev)
                    + jnp.sum(d_for_sum, axis=0, keepdims=True))
        m_s[...] = m_new

        @pl.when(j == num_vocab_tiles - 1)
        def _finalize():
            # sum_v log_softmax(logits)_v = sum_v (logits_v - m) - V * log(sum_v exp(logits_v - m))
            energy_ref[...] = t_s[...] - float(true_vocab) * jnp.log(l_s[...])

    return kernel


def prepare_params(params, *, vocab_tile=512, h_align=16, weight_dtype=jnp.bfloat16):
    """One-time weight preparation (cache across calls): transpose, bf16-cast, fold the
    biases into an extra input column, and pad the vocab to a multiple of the vocab tile."""
    embedding, w1, b1, w2, b2 = params
    H = embedding.shape[1]
    V = w2.shape[1]
    vt = max(128, (min(int(vocab_tile), _round_up(V, 128)) // 128) * 128)
    h_aug = _round_up(H + 1, h_align)
    v_pad = _round_up(V, vt)

    emb_aug = (jnp.zeros((embedding.shape[0], h_aug), jnp.float32)
               .at[:, :H].set(embedding.astype(jnp.float32))
               .at[:, H].set(1.0)).astype(weight_dtype)
    w1T_aug = (jnp.zeros((h_aug, h_aug), jnp.float32)
               .at[:H, :H].set(w1.T.astype(jnp.float32))
               .at[:H, H].set(b1.astype(jnp.float32))).astype(weight_dtype)
    # TODO(synk): optional int8 (v5e/v6e) / fp8 (v7x) quantization of W2^T would halve the
    #             dominant HBM stream; kept in bf16 here.
    w2T_aug = (jnp.zeros((v_pad, h_aug), jnp.float32)
               .at[:V, :H].set(w2.T.astype(jnp.float32))
               .at[:V, H].set(b2.astype(jnp.float32))).astype(weight_dtype)

    return dict(emb_aug=emb_aug, w1T_aug=w1T_aug, w2T_aug=w2T_aug,
                hidden=H, vocab=V, vocab_pad=v_pad, vocab_tile=vt, h_aug=h_aug)


@partial(jax.jit,
         static_argnames=("n_pad", "row_tile", "vocab_tile", "true_vocab",
                          "hidden", "vmem_limit"))
def _masked_energies_padded(tokens, attention_mask, masked_indices,
                            emb_aug, w1T_aug, w2T_aug, *,
                            n_pad, row_tile, vocab_tile, true_vocab, hidden, vmem_limit):
    h_aug = w1T_aug.shape[0]
    vocab_pad = w2T_aug.shape[0]

    # device-side compaction of the masked positions (row-major order, identical to
    # logits[masked_indices] in PyTorch); padded with row 0, which the caller slices off
    row_ids = jnp.nonzero(masked_indices.reshape(-1), size=n_pad, fill_value=0)[0]
    tok_rows = jnp.take(tokens.reshape(-1), row_ids)
    embT = jnp.take(emb_aug, tok_rows, axis=0).T                          # (H_aug, n_pad)
    maskT = jnp.take(attention_mask.reshape(-1).astype(jnp.float32), row_ids)[None, :]

    grid = (n_pad // row_tile, vocab_pad // vocab_tile)   # rows parallel, vocab reduction

    return pl.pallas_call(
        _make_energy_kernel(true_vocab, vocab_tile, vocab_pad, hidden),
        out_shape=jax.ShapeDtypeStruct((1, n_pad), jnp.float32),
        grid_spec=pltpu.PrefetchScalarGridSpec(
            num_scalar_prefetch=0,
            grid=grid,
            in_specs=[
                pl.BlockSpec((h_aug, row_tile), lambda i, j: (0, i)),     # emb^T (+ones row)
                pl.BlockSpec((1, row_tile), lambda i, j: (0, i)),         # mask (lane-dense)
                # constant block index -> DMAed only once; pl.Buffered(1) could drop its
                # second buffer if VMEM ever gets tight
                pl.BlockSpec((h_aug, h_aug), lambda i, j: (0, 0)),        # W1^T (+b1 col)
                pl.BlockSpec((vocab_tile, h_aug), lambda i, j: (j, 0)),   # W2^T (+b2 col) tile
            ],
            out_specs=pl.BlockSpec((1, row_tile), lambda i, j: (0, i)),
            scratch_shapes=[
                pltpu.VMEM((h_aug, row_tile), jnp.bfloat16),   # cached h^T
                pltpu.VMEM((1, row_tile), jnp.float32),        # running max m
                pltpu.VMEM((1, row_tile), jnp.float32),        # running sum exp
                pltpu.VMEM((1, row_tile), jnp.float32),        # running sum(logits - m)
            ],
        ),
        compiler_params=pltpu.CompilerParams(
            dimension_semantics=("parallel", "arbitrary"),
            vmem_limit_bytes=vmem_limit,
        ),
    )(embT, maskT, w1T_aug, w2T_aug)


def text_infilling_energies(tokens, attention_mask, masked_indices, prepared,
                            *, row_tile=128):
    """Energies for the masked positions, shape [N], row-major order (same as
    logits[masked_indices] in PyTorch).  `prepared` comes from prepare_params().
    row_tile: 128 (v5e) or 256 (v6e/v7x); automatically halved down to 128 when there are
    not enough masked rows to fill two tiles (keeps both v7x TensorCores busy)."""
    assert row_tile % 128 == 0
    n = int(jnp.sum(masked_indices))   # single scalar sync; output length must be static

    rt = row_tile
    while rt > 128 and (max(n, 1) + rt - 1) // rt < 2:
        rt //= 2
    n_pad = _round_up(max(n, 1), rt)

    h_aug = prepared["h_aug"]
    vt = prepared["vocab_tile"]
    # resident-VMEM estimate: double-buffered inputs/outputs + scratch + logits temporaries
    est = (2 * h_aug * rt * 2 + 2 * rt * 4 + 2 * h_aug * h_aug * 2
           + 2 * vt * h_aug * 2 + 2 * rt * 4
           + h_aug * rt * 2 + 3 * rt * 4 + 2 * vt * rt * 4)
    vmem_limit = int(min(max(2 * est, 32 * 2 ** 20), 48 * 2 ** 20))

    energies_pad = _masked_energies_padded(
        tokens, attention_mask, masked_indices,
        prepared["emb_aug"], prepared["w1T_aug"], prepared["w2T_aug"],
        n_pad=n_pad, row_tile=rt, vocab_tile=vt,
        true_vocab=prepared["vocab"], hidden=prepared["hidden"],
        vmem_limit=vmem_limit)
    return energies_pad.reshape(-1)[:n]


def _reference_energies(tokens, attention_mask, masked_indices, params):
    embedding, w1, b1, w2, b2 = params
    emb = jnp.take(embedding, tokens, axis=0).astype(jnp.float32)       # [B,S,H]
    h = jnp.tanh(emb @ w1 + b1) * attention_mask[..., None].astype(jnp.float32)
    logits = h @ w2 + b2                                                # [B,S,V]
    masked_logits = logits[masked_indices]                              # [N,V]
    return jax.nn.log_softmax(masked_logits, axis=-1).sum(axis=-1)      # [N]


if __name__ == "__main__":
    key = jax.random.PRNGKey(0)
    # vocab NOT a multiple of the vocab tile -> exercises the padded-vocab masking path,
    # and V_pad/vocab_tile = 2 exercises the streaming (online) log-sum-exp.
    B, S, H, VOCAB = 2, 8, 32, 1000

    k_emb, k_w1, k_b1, k_w2, k_b2, k_tok = jax.random.split(key, 6)
    embedding = jax.random.normal(k_emb, (VOCAB, H), jnp.float32) * 0.1
    w1 = jax.random.normal(k_w1, (H, H), jnp.float32) * 0.1
    b1 = jax.random.normal(k_b1, (H,), jnp.float32) * 0.1
    w2 = jax.random.normal(k_w2, (H, VOCAB), jnp.float32) * 0.1
    b2 = jax.random.normal(k_b2, (VOCAB,), jnp.float32) * 0.1
    params = (embedding, w1, b1, w2, b2)

    tokens = jax.random.randint(k_tok, (B, S), 0, VOCAB, dtype=jnp.int32)
    attention_mask = jnp.ones((B, S), dtype=jnp.int32).at[1, S - 2:].set(0)
    # deterministic masked positions (every 3rd token, only where attended)
    masked_indices = (jnp.arange(S)[None, :] % 3 == 0) & (attention_mask == 1)

    prepared = prepare_params(params, vocab_tile=512)     # cached across calls
    energies = text_infilling_energies(tokens, attention_mask, masked_indices, prepared)
    energies = jax.block_until_ready(energies)

    ref = _reference_energies(tokens, attention_mask, masked_indices, params)
    assert energies.shape == ref.shape, (energies.shape, ref.shape)
    # bf16 matmul operands (f32 accumulation) vs. pure-f32 reference -> modest tolerance
    assert jnp.allclose(energies, ref, rtol=5e-3, atol=1e-2), (energies, ref)

    print("KERNEL_OK")
</pallas_src>

<mosaic_0001>
module attributes {stable_mosaic.version = 11 : i64} {
  func.func private @main(%arg0: i32) attributes {dimension_semantics = [#tpu.dimension_semantics<core_parallel>], iteration_bounds = array<i64: 2>, tpu.core_type = #tpu.core_type<sc_scalar_subcore>, window_params = []} {
    return
  }
}

module attributes {stable_mosaic.version = 11 : i64} {
  func.func private @main(%arg0: i32) attributes {dimension_semantics = [#tpu.dimension_semantics<core_parallel>], iteration_bounds = array<i64: 2>, tpu.core_type = #tpu.core_type<sc_scalar_subcore>, window_params = []} {
    return
  }
}

module attributes {stable_mosaic.version = 11 : i64} {
  func.func @kernel(%arg0: i32, %arg1: i32, %arg2: memref<48x128xbf16, #tpu.memory_space<vmem>>, %arg3: memref<1x128xf32, #tpu.memory_space<vmem>>, %arg4: memref<48x48xbf16, #tpu.memory_space<vmem>>, %arg5: memref<512x48xbf16, #tpu.memory_space<vmem>>, %arg6: memref<1x128xf32, #tpu.memory_space<vmem>>, %arg7: memref<48x128xbf16, #tpu.memory_space<vmem>>, %arg8: memref<1x128xf32, #tpu.memory_space<vmem>>, %arg9: memref<1x128xf32, #tpu.memory_space<vmem>>, %arg10: memref<1x128xf32, #tpu.memory_space<vmem>>) attributes {dimension_semantics = [#tpu.dimension_semantics<parallel>, #tpu.dimension_semantics<arbitrary>], iteration_bounds = array<i64: 1, 2>, scalar_prefetch = 0 : i64, scratch_operands = 4 : i64, tpu.core_type = #tpu.core_type<tc>, window_params = [{transform_indices = @transform_0, window_bounds = array<i64: 48, 128>}, {transform_indices = @transform_1, window_bounds = array<i64: 1, 128>}, {pipeline_mode = #tpu.pipeline_mode<synchronous>, transform_indices = @transform_2, window_bounds = array<i64: 48, 48>}, {transform_indices = @transform_3, window_bounds = array<i64: 512, 48>}, {transform_indices = @transform_4, window_bounds = array<i64: 1, 128>}]} {
    %c0_i32 = arith.constant 0 : i32
    %0 = arith.cmpi eq, %arg1, %c0_i32 : i32
    %1 = arith.extui %0 : i1 to i32
    %c0_i32_0 = arith.constant 0 : i32
    %2 = arith.cmpi ne, %1, %c0_i32_0 : i32
    scf.if %2 {
      %c0_24 = arith.constant 0 : index
      %c0_25 = arith.constant 0 : index
      %54 = vector.load %arg4[%c0_24, %c0_25] : memref<48x48xbf16, #tpu.memory_space<vmem>>, vector<48x48xbf16>
      %c0_26 = arith.constant 0 : index
      %c0_27 = arith.constant 0 : index
      %55 = vector.load %arg2[%c0_26, %c0_27] : memref<48x128xbf16, #tpu.memory_space<vmem>>, vector<48x128xbf16>
      %cst_28 = arith.constant dense<0.000000e+00> : vector<48x128xf32>
      %56 = tpu.matmul %54, %55, %cst_28 {dimension_numbers = #tpu.dot_dimension_numbers<[1], [0], [0], [1], [0, 0, 1, 1], [], []>} : vector<48x48xbf16>, vector<48x128xbf16>, vector<48x128xf32> -> vector<48x128xf32>
      %57 = math.tanh %56 : vector<48x128xf32>
      %c0_29 = arith.constant 0 : index
      %c0_30 = arith.constant 0 : index
      %58 = vector.load %arg3[%c0_29, %c0_30] : memref<1x128xf32, #tpu.memory_space<vmem>>, vector<1x128xf32>
      %59 = vector.broadcast %58 : vector<1x128xf32> to vector<48x128xf32>
      %60 = arith.mulf %57, %59 : vector<48x128xf32>
      %61 = tpu.iota {dimensions = array<i32: 0>} : vector<48x128xi32>
      %c32_i32 = arith.constant 32 : i32
      %62 = vector.broadcast %c32_i32 : i32 to vector<48x128xi32>
      %63 = arith.cmpi sge, %61, %62 : vector<48x128xi32>
      %cst_31 = arith.constant 1.000000e+00 : f32
      %64 = vector.broadcast %cst_31 : f32 to vector<48x128xf32>
      %65 = arith.select %63, %64, %60 : vector<48x128xi1>, vector<48x128xf32>
      %66 = arith.truncf %65 : vector<48x128xf32> to vector<48x128xbf16>
      %c0_32 = arith.constant 0 : index
      %c0_33 = arith.constant 0 : index
      %67 = vector.load %arg7[%c0_32, %c0_33] : memref<48x128xbf16, #tpu.memory_space<vmem>>, vector<48x128xbf16>
      tpu.vector_store %arg7[%c0_32, %c0_33], %66 {strides = array<i32>} : memref<48x128xbf16, #tpu.memory_space<vmem>>, vector<48x128xbf16>,
      %cst_34 = arith.constant -1.000000e+30 : f32
      %68 = vector.broadcast %cst_34 : f32 to vector<1x128xf32>
      %c0_35 = arith.constant 0 : index
      %c0_36 = arith.constant 0 : index
      %69 = vector.load %arg8[%c0_35, %c0_36] : memref<1x128xf32, #tpu.memory_space<vmem>>, vector<1x128xf32>
      tpu.vector_store %arg8[%c0_35, %c0_36], %68 {strides = array<i32>} : memref<1x128xf32, #tpu.memory_space<vmem>>, vector<1x128xf32>,
      %cst_37 = arith.constant 0.000000e+00 : f32
      %70 = vector.broadcast %cst_37 : f32 to vector<1x128xf32>
      %c0_38 = arith.constant 0 : index
      %c0_39 = arith.constant 0 : index
      %71 = vector.load %arg9[%c0_38, %c0_39] : memref<1x128xf32, #tpu.memory_space<vmem>>, vector<1x128xf32>
      tpu.vector_store %arg9[%c0_38, %c0_39], %70 {strides = array<i32>} : memref<1x128xf32, #tpu.memory_space<vmem>>, vector<1x128xf32>,
      %cst_40 = arith.constant 0.000000e+00 : f32
      %72 = vector.broadcast %cst_40 : f32 to vector<1x128xf32>
      %c0_41 = arith.constant 0 : index
      %c0_42 = arith.constant 0 : index
      %73 = vector.load %arg10[%c0_41, %c0_42] : memref<1x128xf32, #tpu.memory_space<vmem>>, vector<1x128xf32>
      tpu.vector_store %arg10[%c0_41, %c0_42], %72 {strides = array<i32>} : memref<1x128xf32, #tpu.memory_space<vmem>>, vector<1x128xf32>,
    } else {
    }
    %c0 = arith.constant 0 : index
    %c0_1 = arith.constant 0 : index
    %3 = vector.load %arg5[%c0, %c0_1] : memref<512x48xbf16, #tpu.memory_space<vmem>>, vector<512x48xbf16>
    %c0_2 = arith.constant 0 : index
    %c0_3 = arith.constant 0 : index
    %4 = vector.load %arg7[%c0_2, %c0_3] : memref<48x128xbf16, #tpu.memory_space<vmem>>, vector<48x128xbf16>
    %cst = arith.constant dense<0.000000e+00> : vector<512x128xf32>
    %5 = tpu.matmul %3, %4, %cst {dimension_numbers = #tpu.dot_dimension_numbers<[1], [0], [0], [1], [0, 0, 1, 1], [], []>} : vector<512x48xbf16>, vector<48x128xbf16>, vector<512x128xf32> -> vector<512x128xf32>
    %6 = tpu.iota {dimensions = array<i32: 0>} : vector<512x1xi32>
    %c512_i32 = arith.constant 512 : i32
    %7 = arith.muli %arg1, %c512_i32 : i32
    %8 = vector.broadcast %7 : i32 to vector<512x1xi32>
    %9 = arith.addi %8, %6 : vector<512x1xi32>
    %c1000_i32 = arith.constant 1000 : i32
    %10 = vector.broadcast %c1000_i32 : i32 to vector<512x1xi32>
    %11 = arith.cmpi slt, %9, %10 : vector<512x1xi32>
    %cst_4 = arith.constant 0xFF800000 : f32
    %12 = vector.shape_cast %11 : vector<512x1xi1> to vector<512x1xi1>
    %13 = vector.broadcast %12 : vector<512x1xi1> to vector<512x128xi1>
    %14 = vector.broadcast %cst_4 : f32 to vector<512x128xf32>
    %15 = arith.select %13, %5, %14 : vector<512x128xi1>, vector<512x128xf32>
    %c0_5 = arith.constant 0 : index
    %c0_6 = arith.constant 0 : index
    %16 = vector.load %arg8[%c0_5, %c0_6] : memref<1x128xf32, #tpu.memory_space<vmem>>, vector<1x128xf32>
    %cst_7 = arith.constant dense<0xFF800000> : vector<128xf32>
    %17 = vector.multi_reduction <maximumf>, %15, %cst_7 [0] : vector<512x128xf32> to vector<128xf32>
    %18 = vector.shape_cast %17 : vector<128xf32> to vector<1x128xf32>
    %19 = arith.maximumf %16, %18 : vector<1x128xf32>
    %20 = vector.broadcast %19 : vector<1x128xf32> to vector<512x128xf32>
    %21 = arith.subf %5, %20 : vector<512x128xf32>
    %22 = math.exp %21 : vector<512x128xf32>
    %cst_8 = arith.constant 0.000000e+00 : f32
    %23 = vector.shape_cast %11 : vector<512x1xi1> to vector<512x1xi1>
    %24 = vector.broadcast %23 : vector<512x1xi1> to vector<512x128xi1>
    %25 = vector.broadcast %cst_8 : f32 to vector<512x128xf32>
    %26 = arith.select %24, %22, %25 : vector<512x128xi1>, vector<512x128xf32>
    %cst_9 = arith.constant 0.000000e+00 : f32
    %27 = vector.shape_cast %11 : vector<512x1xi1> to vector<512x1xi1>
    %28 = vector.broadcast %27 : vector<512x1xi1> to vector<512x128xi1>
    %29 = vector.broadcast %cst_9 : f32 to vector<512x128xf32>
    %30 = arith.select %28, %21, %29 : vector<512x128xi1>, vector<512x128xf32>
    %31 = arith.subf %16, %19 : vector<1x128xf32>
    %32 = math.exp %31 : vector<1x128xf32>
    %c0_10 = arith.constant 0 : index
    %c0_11 = arith.constant 0 : index
    %33 = vector.load %arg9[%c0_10, %c0_11] : memref<1x128xf32, #tpu.memory_space<vmem>>, vector<1x128xf32>
    %34 = arith.mulf %32, %33 : vector<1x128xf32>
    %cst_12 = arith.constant dense<0.000000e+00> : vector<128xf32>
    %35 = vector.multi_reduction <add>, %26, %cst_12 [0] : vector<512x128xf32> to vector<128xf32>
    %36 = vector.shape_cast %35 : vector<128xf32> to vector<1x128xf32>
    %37 = arith.addf %34, %36 : vector<1x128xf32>
    %c0_13 = arith.constant 0 : index
    %c0_14 = arith.constant 0 : index
    %38 = vector.load %arg9[%c0_13, %c0_14] : memref<1x128xf32, #tpu.memory_space<vmem>>, vector<1x128xf32>
    tpu.vector_store %arg9[%c0_13, %c0_14], %37 {strides = array<i32>} : memref<1x128xf32, #tpu.memory_space<vmem>>, vector<1x128xf32>,
    %c512_i32_15 = arith.constant 512 : i32
    %39 = arith.muli %arg1, %c512_i32_15 : i32
    %40 = arith.sitofp %39 : i32 to f32
    %c0_16 = arith.constant 0 : index
    %c0_17 = arith.constant 0 : index
    %41 = vector.load %arg10[%c0_16, %c0_17] : memref<1x128xf32, #tpu.memory_space<vmem>>, vector<1x128xf32>
    %42 = arith.subf %19, %16 : vector<1x128xf32>
    %43 = vector.broadcast %40 : f32 to vector<1x128xf32>
    %44 = arith.mulf %43, %42 : vector<1x128xf32>
    %45 = arith.subf %41, %44 : vector<1x128xf32>
    %cst_18 = arith.constant dense<0.000000e+00> : vector<128xf32>
    %46 = vector.multi_reduction <add>, %30, %cst_18 [0] : vector<512x128xf32> to vector<128xf32>
    %47 = vector.shape_cast %46 : vector<128xf32> to vector<1x128xf32>
    %48 = arith.addf %45, %47 : vector<1x128xf32>
    %c0_19 = arith.constant 0 : index
    %c0_20 = arith.constant 0 : index
    %49 = vector.load %arg10[%c0_19, %c0_20] : memref<1x128xf32, #tpu.memory_space<vmem>>, vector<1x128xf32>
    tpu.vector_store %arg10[%c0_19, %c0_20], %48 {strides = array<i32>} : memref<1x128xf32, #tpu.memory_space<vmem>>, vector<1x128xf32>,
    %c0_21 = arith.constant 0 : index
    %c0_22 = arith.constant 0 : index
    %50 = vector.load %arg8[%c0_21, %c0_22] : memref<1x128xf32, #tpu.memory_space<vmem>>, vector<1x128xf32>
    tpu.vector_store %arg8[%c0_21, %c0_22], %19 {strides = array<i32>} : memref<1x128xf32, #tpu.memory_space<vmem>>, vector<1x128xf32>,
    %c1_i32 = arith.constant 1 : i32
    %51 = arith.cmpi eq, %arg1, %c1_i32 : i32
    %52 = arith.extui %51 : i1 to i32
    %c0_i32_23 = arith.constant 0 : i32
    %53 = arith.cmpi ne, %52, %c0_i32_23 : i32
    scf.if %53 {
      %c0_24 = arith.constant 0 : index
      %c0_25 = arith.constant 0 : index
      %54 = vector.load %arg10[%c0_24, %c0_25] : memref<1x128xf32, #tpu.memory_space<vmem>>, vector<1x128xf32>
      %c0_26 = arith.constant 0 : index
      %c0_27 = arith.constant 0 : index
      %55 = vector.load %arg9[%c0_26, %c0_27] : memref<1x128xf32, #tpu.memory_space<vmem>>, vector<1x128xf32>
      %56 = math.log %55 : vector<1x128xf32>
      %cst_28 = arith.constant 1.000000e+03 : f32
      %57 = vector.broadcast %cst_28 : f32 to vector<1x128xf32>
      %58 = arith.mulf %57, %56 : vector<1x128xf32>
      %59 = arith.subf %54, %58 : vector<1x128xf32>
      %c0_29 = arith.constant 0 : index
      %c0_30 = arith.constant 0 : index
      %60 = vector.load %arg6[%c0_29, %c0_30] : memref<1x128xf32, #tpu.memory_space<vmem>>, vector<1x128xf32>
      tpu.vector_store %arg6[%c0_29, %c0_30], %59 {strides = array<i32>} : memref<1x128xf32, #tpu.memory_space<vmem>>, vector<1x128xf32>,
    } else {
    }
    return
  }
  func.func @transform_0(%arg0: i32, %arg1: i32) -> (i32, i32) {
    %c0_i32 = arith.constant 0 : i32
    %c0_i32_0 = arith.constant 0 : i32
    return %c0_i32, %arg0 : i32, i32
  }
  func.func @transform_1(%arg0: i32, %arg1: i32) -> (i32, i32) {
    %c0_i32 = arith.constant 0 : i32
    %c0_i32_0 = arith.constant 0 : i32
    return %c0_i32, %arg0 : i32, i32
  }
  func.func @transform_2(%arg0: i32, %arg1: i32) -> (i32, i32) {
    %c0_i32 = arith.constant 0 : i32
    %c0_i32_0 = arith.constant 0 : i32
    %c0_i32_1 = arith.constant 0 : i32
    return %c0_i32, %c0_i32_0 : i32, i32
  }
  func.func @transform_3(%arg0: i32, %arg1: i32) -> (i32, i32) {
    %c0_i32 = arith.constant 0 : i32
    %c0_i32_0 = arith.constant 0 : i32
    return %arg1, %c0_i32 : i32, i32
  }
  func.func @transform_4(%arg0: i32, %arg1: i32) -> (i32, i32) {
    %c0_i32 = arith.constant 0 : i32
    %c0_i32_0 = arith.constant 0 : i32
    return %c0_i32, %arg0 : i32, i32
  }
}

</mosaic_0001>

<llo_original>
// kernel: _masked_energies_padded.1
$region0: #{_masked_energies_padded.1}
  #allocation0 [shape = 'u32[]', space=smem, size = 0x4, offset = 0x4, fixed_abs, tag = 'smem constant byte address 0x4 - core index']
  #allocation1 [shape = 'u32[144,128]{1,0:T(1,128)}', space=vmem, size = 0x12000, scoped, tag = 'internal scratch']
  #allocation2 [shape = 'bf16[48,128]{1,0:T(16,128)(2,1)}', space=vmem, size = 0x3000, scoped, tag = 'scratch operand']
  #allocation3 [shape = 'f32[1,128]{1,0:T(1,128)}', space=vmem, size = 0x200, scoped, tag = 'scratch operand']
  #allocation4 [shape = 'f32[1,128]{1,0:T(1,128)}', space=vmem, size = 0x200, scoped, tag = 'scratch operand']
  #allocation5 [shape = 'f32[1,128]{1,0:T(1,128)}', space=vmem, size = 0x200, scoped, tag = 'scratch operand']
  %s0 = inlined_call_operand.vmem [shape: bf16[48,128], index: 0, kind: input, shape index: {}]
  %s1 = inlined_call_operand.vmem [shape: f32[1,128], index: 1, kind: input, shape index: {}]
  %s2 = inlined_call_operand.vmem [shape: bf16[48,48], index: 2, kind: input, shape index: {}]
  %s3 = inlined_call_operand.vmem [shape: bf16[1024,48], index: 3, kind: input, shape index: {}]
  %s4 = inlined_call_operand.hbm [shape: f32[1,128], index: 4, kind: output, shape index: {}]
  %s5 = sld [smem:[#allocation0]]
  $region57: #{_masked_energies_padded.1} parent=0
    _
  %s7 = ssub.s32 1, %s5
  %s8 = scalar_select 0, %s7, %s5
  $region1: #{_masked_energies_padded.1} parent=0
    #allocation6 [shape = 'u8[512]{0}', space=vmem, size = 0x400, scoped, tag = 'output window, operand 0, single buffered']
    #allocation7 [shape = 's32[2]{0}', space=sflag, size = 0x8, scoped, tag = 'scoped memory for _masked_energies_padded.1']
    %9 = vsyncpa [#allocation7], 0
    loop: start=0, step=1, limit=4
    $region2: #{_masked_energies_padded.1} parent=1 // loop_pre_header
      _
    $region3: #{_masked_energies_padded.1} parent=1 // loop_header
      %s11 = sphi 0, %s15
      %p12 = scmp.ge.s32.totalorder %s11, 4
      %s18 = sphi 0, %s30
      %s19 = sphi 0, %s26
      %s20 = sphi 0, %s18
      %s21 = sphi 0, %s19
      %s22 = sphi 0, %s20
      %s23 = sphi 0, %s21
      %s33 = sphi 0, %s35
      %s36 = sphi 0, %s33
      %s37 = sphi 0, %s36
      %s53 = sphi 0, %s37
      %s59 = sphi 0, %s61
      %s62 = sphi 0, %s59
      %s63 = sphi 0, %s62
      %s79 = sphi 0, %s63
      %s83 = sphi 0, %s83
      %s85 = sphi 0, %s83
      %s86 = sphi 0, %s85
      %s100 = sphi 0, %s86
      %s106 = sphi 0, %s108
      %s109 = sphi 0, %s106
      %s110 = sphi 0, %s109
      %s126 = sphi 0, %s110
      %s132 = sphi 0, %s134
      %s135 = sphi 0, %s132
      %s136 = sphi 0, %s135
      %s152 = sphi 0, %s136
    $region4: #{_masked_energies_padded.1} parent=1 // loop_header_branch
      %14 = sbr.rel (%p12) target = $region8
    $region5: #{_masked_energies_padded.1} parent=1 // loop_body
      %s16 = ssub.s32 %s11, 1
      %s17 = ssub.s32 %s11, 2
      %s24 = sadd.s32 1, %s19
      %p25 = scmp.ge.s32.totalorder %s24, 2
      %s26 = scalar_select %p25, 0, %s24
      %s27 = sadd.s32 1, %s18
      %s28 = scalar_select %p25, %s27, %s18
      %p29 = scmp.ge.s32.totalorder %s28, 1
      %s30 = scalar_select %p29, 0, %s28
      %s31 = ssub.s32 %s18, %s30
      %p32 = scmp.eq.s32.totalorder %s31, 0
      %s34 = sadd.s32 %s33, 1
      %s35 = scalar_select %p32, %s33, %s34
      %p38 = pneg %p32
      %p39 = scmp.eq.s32.totalorder %s11, 1
      %p40 = por %p38, %p39
      %p41 = scmp.ne.s32.totalorder %s33, %s36
      %p42 = scmp.eq.s32.totalorder %s11, 0
      %p43 = por %p41, %p42
      %p44 = scmp.ne.s32.totalorder %s33, %s36
      %p45 = scmp.eq.s32.totalorder %s16, 1
      %p46 = por %p44, %p45
      %p47 = scmp.ne.s32.totalorder %s36, %s37
      %p48 = scmp.eq.s32.totalorder %s16, 0
      %p49 = por %p47, %p48
      %p50 = scmp.ne.s32.totalorder %s36, %s37
      %p51 = scmp.eq.s32.totalorder %s17, 1
      %p52 = por %p50, %p51
      %p54 = scmp.ne.s32.totalorder %s37, %s53
      %p55 = scmp.eq.s32.totalorder %s17, 0
      %p56 = por %p54, %p55
      %s57 = ssub.s32 %s18, %s30
      %p58 = scmp.eq.s32.totalorder %s57, 0
      %s60 = sadd.s32 %s59, 1
      %s61 = scalar_select %p58, %s59, %s60
      %p64 = pneg %p58
      %p65 = scmp.eq.s32.totalorder %s11, 1
      %p66 = por %p64, %p65
      %p67 = scmp.ne.s32.totalorder %s59, %s62
      %p68 = scmp.eq.s32.totalorder %s11, 0
      %p69 = por %p67, %p68
      %p70 = scmp.ne.s32.totalorder %s59, %s62
      %p71 = scmp.eq.s32.totalorder %s16, 1
      %p72 = por %p70, %p71
      %p73 = scmp.ne.s32.totalorder %s62, %s63
      %p74 = scmp.eq.s32.totalorder %s16, 0
      %p75 = por %p73, %p74
      %p76 = scmp.ne.s32.totalorder %s62, %s63
      %p77 = scmp.eq.s32.totalorder %s17, 1
      %p78 = por %p76, %p77
      %p80 = scmp.ne.s32.totalorder %s63, %s79
      %p81 = scmp.eq.s32.totalorder %s17, 0
      %p82 = por %p80, %p81
      %s84 = sadd.s32 %s83, 1
      %p87 = scmp.eq.s32.totalorder %s11, 1
      %p88 = scmp.ne.s32.totalorder %s83, %s85
      %p89 = scmp.eq.s32.totalorder %s11, 0
      %p90 = por %p88, %p89
      %p91 = scmp.ne.s32.totalorder %s83, %s85
      %p92 = scmp.eq.s32.totalorder %s16, 1
      %p93 = por %p91, %p92
      %p94 = scmp.ne.s32.totalorder %s85, %s86
      %p95 = scmp.eq.s32.totalorder %s16, 0
      %p96 = por %p94, %p95
      %p97 = scmp.ne.s32.totalorder %s85, %s86
      %p98 = scmp.eq.s32.totalorder %s17, 1
      %p99 = por %p97, %p98
      %p101 = scmp.ne.s32.totalorder %s86, %s100
      %p102 = scmp.eq.s32.totalorder %s17, 0
      %p103 = por %p101, %p102
      %s104 = ssub.s32 %s19, %s26
      %p105 = scmp.eq.s32.totalorder %s104, 0
      %s107 = sadd.s32 %s106, 1
      %s108 = scalar_select %p105, %s106, %s107
      %p111 = pneg %p105
      %p112 = scmp.eq.s32.totalorder %s11, 1
      %p113 = por %p111, %p112
      %p114 = scmp.ne.s32.totalorder %s106, %s109
      %p115 = scmp.eq.s32.totalorder %s11, 0
      %p116 = por %p114, %p115
      %p117 = scmp.ne.s32.totalorder %s106, %s109
      %p118 = scmp.eq.s32.totalorder %s16, 1
      %p119 = por %p117, %p118
      %p120 = scmp.ne.s32.totalorder %s109, %s110
      %p121 = scmp.eq.s32.totalorder %s16, 0
      %p122 = por %p120, %p121
      %p123 = scmp.ne.s32.totalorder %s109, %s110
      %p124 = scmp.eq.s32.totalorder %s17, 1
      %p125 = por %p123, %p124
      %p127 = scmp.ne.s32.totalorder %s110, %s126
      %p128 = scmp.eq.s32.totalorder %s17, 0
      %p129 = por %p127, %p128
      %s130 = ssub.s32 %s18, %s30
      %p131 = scmp.eq.s32.totalorder %s130, 0
      %s133 = sadd.s32 %s132, 1
      %s134 = scalar_select %p131, %s132, %s133
      %p137 = pneg %p131
      %p138 = scmp.eq.s32.totalorder %s11, 1
      %p139 = por %p137, %p138
      %p140 = scmp.ne.s32.totalorder %s132, %s135
      %p141 = scmp.eq.s32.totalorder %s11, 0
      %p142 = por %p140, %p141
      %p143 = scmp.ne.s32.totalorder %s132, %s135
      %p144 = scmp.eq.s32.totalorder %s16, 1
      %p145 = por %p143, %p144
      %p146 = scmp.ne.s32.totalorder %s135, %s136
      %p147 = scmp.eq.s32.totalorder %s16, 0
      %p148 = por %p146, %p147
      %p149 = scmp.ne.s32.totalorder %s135, %s136
      %p150 = scmp.eq.s32.totalorder %s17, 1
      %p151 = por %p149, %p150
      %p153 = scmp.ne.s32.totalorder %s136, %s152
      %p154 = scmp.eq.s32.totalorder %s17, 0
      %p155 = por %p153, %p154
      %p156 = scmp.le.s32.totalorder 1, %s11
      %p157 = scmp.lt.s32.totalorder %s11, 3
      %p158 = pnand %p156, %p157
      %p159 = pneg %p158
      // Predicated region
      $region9: #{_masked_energies_padded.1} parent=5 // pred_check
        _
      $region10: #{_masked_energies_padded.1} parent=5 // pred_check_branch
        %161 = sbr.rel (%p158) target = $region12
      $region11: #{_masked_energies_padded.1} parent=5 // pred_region
        %s162 = ssub.s32 %s11, 1
        // Predicated region
        $region13: #{_masked_energies_padded.1} parent=11 // pred_check
          %p163 = pneg %p49
        $region14: #{_masked_energies_padded.1} parent=11 // pred_check_branch
          %165 = sbr.rel (%p163) target = $region16
        $region15: #{_masked_energies_padded.1} parent=11 // pred_region
          %p166 = scmp.lt.s32.totalorder %s20, 0
          %s167 = scalar_select %p166, %s20, 0
          %s168 = smul.addr %s167, 4
          %s169 = scalar_lea.vmem %s0, %s168
        $region16: #{_masked_energies_padded.1} parent=11 // pred_fallthru
          _
        // Predicated region
        $region17: #{_masked_energies_padded.1} parent=11 // pred_check
          %p170 = pneg %p75
        $region18: #{_masked_energies_padded.1} parent=11 // pred_check_branch
          %172 = sbr.rel (%p170) target = $region20
        $region19: #{_masked_energies_padded.1} parent=11 // pred_region
          %p173 = scmp.lt.s32.totalorder %s20, 0
          %s174 = scalar_select %p173, %s20, 0
          %s175 = scalar_lea.vmem %s1, %s174
        $region20: #{_masked_energies_padded.1} parent=11 // pred_fallthru
          _
        // Predicated region
        $region21: #{_masked_energies_padded.1} parent=11 // pred_check
          %p176 = pneg %p96
        $region22: #{_masked_energies_padded.1} parent=11 // pred_check_branch
          %178 = sbr.rel (%p176) target = $region24
        $region23: #{_masked_energies_padded.1} parent=11 // pred_region
          _
        $region24: #{_masked_energies_padded.1} parent=11 // pred_fallthru
          _
      $region12: #{_masked_energies_padded.1} parent=5 // pred_fallthru
        _
      %p179 = scmp.lt.s32.totalorder %s11, 2
      // Predicated region
      $region25: #{_masked_energies_padded.1} parent=5 // pred_check
        %p180 = pneg %p179
      $region26: #{_masked_energies_padded.1} parent=5 // pred_check_branch
        %182 = sbr.rel (%p180) target = $region28
      $region27: #{_masked_energies_padded.1} parent=5 // pred_region
        // Predicated region
        $region29: #{_masked_energies_padded.1} parent=27 // pred_check
          %p183 = pneg %p116
        $region30: #{_masked_energies_padded.1} parent=27 // pred_check_branch
          %185 = sbr.rel (%p183) target = $region32
        $region31: #{_masked_energies_padded.1} parent=27 // pred_region
          %s186 = smul.u32 64, %s19
          %p187 = scmp.lt.s32.totalorder %s186, 127
          %s188 = scalar_select %p187, %s186, 127
          %s189 = smul.addr %s188, 4
          %s190 = scalar_lea.vmem %s3, %s189
          %s191 = smul.u32 64, %s19
        $region32: #{_masked_energies_padded.1} parent=27 // pred_fallthru
          _
      $region28: #{_masked_energies_padded.1} parent=5 // pred_fallthru
        _
      %p192 = scmp.le.s32.totalorder 1, %s11
      %p193 = scmp.lt.s32.totalorder %s11, 3
      %p194 = pnand %p192, %p193
      %p195 = pneg %p194
      // Predicated region
      $region33: #{_masked_energies_padded.1} parent=5 // pred_check
        _
      $region34: #{_masked_energies_padded.1} parent=5 // pred_check_branch
        %197 = sbr.rel (%p194) target = $region36
      $region35: #{_masked_energies_padded.1} parent=5 // pred_region
        %s198 = ssub.s32 %s11, 1
        %p199 = scmp.lt.s32.totalorder %s20, 0
        %s200 = scalar_select %p199, %s20, 0
        %s201 = smul.addr %s200, 4
        %s202 = scalar_lea.vmem %s0, %s201
        %p203 = pneg %p49
        %p204 = pneg %p46
        %p205 = scmp.lt.s32.totalorder %s20, 0
        %s206 = scalar_select %p205, %s20, 0
        %s207 = scalar_lea.vmem %s1, %s206
        %p208 = pneg %p75
        %p209 = pneg %p72
        %p210 = pneg %p96
        %p211 = pneg %p93
        %s212 = smul.u32 64, %s21
        %p213 = scmp.lt.s32.totalorder %s212, 127
        %s214 = scalar_select %p213, %s212, 127
        %s215 = smul.addr %s214, 4
        %s216 = scalar_lea.vmem %s3, %s215
        %p217 = pneg %p122
        %p218 = pneg %p119
        %p219 = pneg %p148
        %p220 = pneg %p145
        %p221 = scmp.lt.s32.totalorder %s20, 0
        %s222 = scalar_select %p221, %s20, 0
        %s223 = smul.addr %s222, 4
        %s224 = scalar_lea.vmem %s0, %s223
        %p225 = scmp.lt.s32.totalorder %s20, 0
        %s226 = scalar_select %p225, %s20, 0
        %s227 = scalar_lea.vmem %s1, %s226
        %s228 = smul.u32 64, %s21
        %p229 = scmp.lt.s32.totalorder %s228, 127
        %s230 = scalar_select %p229, %s228, 127
        %s231 = smul.addr %s230, 4
        %s232 = scalar_lea.vmem %s3, %s231
        %s233 = smul.u32 64, %s21
        %p235 = scmp.eq.s32.totalorder %s21, 0
        // Predicated region
        $region37: #{_masked_energies_padded.1} parent=35 // pred_check
          %p236 = pneg %p235
        $region38: #{_masked_energies_padded.1} parent=35 // pred_check_branch
          %238 = sbr.rel (%p236) target = $region40
        $region39: #{_masked_energies_padded.1} parent=35 // pred_region
          %v239 = vld [vmem:[%s2] sm:$0xf]
          %v240 = vld [vmem:[%s2 + $0x4] sm:$0xf]
          %v241 = vld [vmem:[%s2 + $0x8] sm:$0xf]
          %v242 = vld [vmem:[%s2 + $0xc] sm:$0xf]
          %v243 = vld [vmem:[%s2 + $0x10] sm:$0xf]
          %v244 = vld [vmem:[%s2 + $0x14] sm:$0xf]
          %v245 = vld [vmem:[%s224] sm:$0xf]
          %v246 = vld [vmem:[%s224 + $0x4] sm:$0xf]
          %v247 = vld [vmem:[%s224 + $0x8] sm:$0xf]
          %v248 = vld [vmem:[%s224 + $0xc] sm:$0xf]
          %v249 = vld [vmem:[%s224 + $0x10] sm:$0xf]
          %v250 = vld [vmem:[%s224 + $0x14] sm:$0xf]
          %v257 = vunpack.c.l.b16 %v239
          %v258 = vunpack.c.l.b16 %v240
          %v259 = vunpack.c.l.b16 %v241
          %v260 = vunpack.c.l.b16 %v242
          %v261 = vunpack.c.l.b16 %v243
          %v262 = vunpack.c.l.b16 %v244
          %v263 = vpack.c.b16 %v258, %v257
          %v264 = vpack.c.b16 %v260, %v259
          %v265 = vpack.c.b16 %v262, %v261
          %v272 = vunpack.c.l.b16 %v245
          %v273 = vunpack.c.l.b16 %v246
          %v274 = vunpack.c.l.b16 %v247
          %v275 = vunpack.c.l.b16 %v248
          %v276 = vunpack.c.l.b16 %v249
          %v277 = vunpack.c.l.b16 %v250
          %v278 = vpack.c.b16 %v273, %v272
          %v279 = vpack.c.b16 %v275, %v274
          %v280 = vpack.c.b16 %v277, %v276
          %vm284 = vcmask 392192
          %v286 = vsel %vm284, %v263, 0
          %v289 = vsel %vm284, %v264, 0
          %v292 = vsel %vm284, %v265, 0
          %294 = vmatprep.subr.bf16.mxu0 0
          %295 = vmatpush1.bf16.msra.mxu0 %v278
          %296 = vmatprep.subr.bf16.mxu0 0
          %297 = vmatpush1.bf16.msra.mxu0 %v279
          %298 = vmatprep.subr.bf16.mxu0 0
          %299 = vmatpush1.bf16.msra.mxu0 %v280
          %300 = vmatprep.subr.bf16.mxu0 0
          %301 = vmatpush1.bf16.msra.mxu0 0
          %302 = vmatprep.subr.bf16.mxu0 0
          %303 = vmatpush1.bf16.msra.mxu0 0
          %304 = vmatprep.subr.bf16.mxu0 0
          %305 = vmatpush1.bf16.msra.mxu0 0
          %306 = vmatprep.subr.bf16.mxu0 0
          %307 = vmatpush1.bf16.msra.mxu0 0
          %308 = vmatprep.subr.bf16.mxu0 0
          %309 = vmatpush1.bf16.msra.mxu0 0
          %310 = vmatprep.subr.bf16.mxu0 0
          %311 = vmatpush1.bf16.msra.mxu0 0
          %312 = vmatprep.subr.bf16.mxu0 0
          %313 = vmatpush1.bf16.msra.mxu0 0
          %314 = vmatprep.subr.bf16.mxu0 0
          %315 = vmatpush1.bf16.msra.mxu0 0
          %316 = vmatprep.subr.bf16.mxu0 0
          %317 = vmatpush1.bf16.msra.mxu0 0
          %318 = vmatprep.subr.bf16.mxu0 0
          %319 = vmatpush1.bf16.msra.mxu0 0
          %320 = vmatprep.subr.bf16.mxu0 0
          %321 = vmatpush1.bf16.msra.mxu0 0
          %322 = vmatprep.subr.bf16.mxu0 0
          %323 = vmatpush1.bf16.msra.mxu0 0
          %324 = vmatprep.subr.bf16.mxu0 0
          %325 = vmatpush1.bf16.msra.mxu0 0
          %326 = vmatprep.mubr.bf16.mxu0 0
          %327 = vmatmul.mubr.bf16.gmra.mrb[0].mxu0 %v286
          %v328 = vpop.f32.mrb[0].mxu0
          %v329 = vadd.f32 0.0, %v328
          %v330 = vpop.f32.mrb[0].mxu0
          %v331 = vpop.f32.mrb[0].mxu0
          %v332 = vadd.f32 0.0, %v331
          %v333 = vpop.f32.mrb[0].mxu0
          %334 = vmatprep.mubr.bf16.mxu0 0
          %335 = vmatmul.mubr.bf16.gmra.mrb[0].mxu0 %v289
          %v336 = vpop.f32.mrb[0].mxu0
          %v337 = vadd.f32 0.0, %v336
          %v338 = vpop.f32.mrb[0].mxu0
          %v339 = vpop.f32.mrb[0].mxu0
          %v340 = vadd.f32 0.0, %v339
          %v341 = vpop.f32.mrb[0].mxu0
          %342 = vmatprep.mubr.bf16.mxu0 0
          %343 = vmatmul.mubr.bf16.gmra.mrb[0].mxu0 %v292
          %v344 = vpop.f32.mrb[0].mxu0
          %v345 = vadd.f32 0.0, %v344
          %v346 = vpop.f32.mrb[0].mxu0
          %v347 = vpop.f32.mrb[0].mxu0
          %v348 = vadd.f32 0.0, %v347
          %v349 = vpop.f32.mrb[0].mxu0
          %350 = vdwg.mxu0
          %v351 = vtanh.pop %v329
          %v352 = vtanh.pop %v332
          %v353 = vtanh.pop %v337
          %v354 = vtanh.pop %v340
          %v355 = vtanh.pop %v345
          %v356 = vtanh.pop %v348
          %v357 = vld [vmem:[%s227] sm:$0x1]
          %v359 = vlaneseq
          %v360 = vshrl.u32 %v359, 7
          %v361 = vsub.s32 0, %v360
          %v362 = vrot.slane %v357, %v361
          %v364 = vmul.f32 %v351, %v362
          %v365 = vmul.f32 %v352, %v362
          %v366 = vmul.f32 %v353, %v362
          %v367 = vmul.f32 %v354, %v362
          %v368 = vmul.f32 %v355, %v362
          %v369 = vmul.f32 %v356, %v362
          %v370 = vlaneseq
          %v371 = vshrl.u32 %v370, 7
          %v372 = vadd.s32 %v371, 8
          %v373 = vadd.s32 %v371, 16
          %v374 = vadd.s32 %v371, 24
          %v375 = vadd.s32 %v371, 32
          %v376 = vadd.s32 %v371, 40
          %vm377 = vcmp.ge.s32.totalorder %v371, 32
          %vm378 = vcmp.ge.s32.totalorder %v372, 32
          %vm379 = vcmp.ge.s32.totalorder %v373, 32
          %vm380 = vcmp.ge.s32.totalorder %v374, 32
          %vm381 = vcmp.ge.s32.totalorder %v375, 32
          %vm382 = vcmp.ge.s32.totalorder %v376, 32
          %v383 = vsel %vm377, 1.0, %v364
          %v384 = vsel %vm378, 1.0, %v365
          %v385 = vsel %vm379, 1.0, %v366
          %v386 = vsel %vm380, 1.0, %v367
          %v387 = vsel %vm381, 1.0, %v368
          %v388 = vsel %vm382, 1.0, %v369
          %v389 = vpack.c.bf16 %v384, %v383
          %v390 = vpack.c.bf16 %v386, %v385
          %v391 = vpack.c.bf16 %v388, %v387
          %392 = vst [vmem:[#allocation2] sm:$0xff] %v389
          %393 = vst [vmem:[#allocation2 + $0x8] sm:$0xff] %v390
          %394 = vst [vmem:[#allocation2 + $0x10] sm:$0xff] %v391
          %395 = vst [vmem:[#allocation3] sm:$0x1] -1e+30
          %396 = vst [vmem:[#allocation4] sm:$0x1] 0.0
          %397 = vst [vmem:[#allocation5] sm:$0x1] 0.0
        $region40: #{_masked_energies_padded.1} parent=35 // pred_fallthru
          _
        %v398 = vld [vmem:[%s232] sm:$0xf]
        %v399 = vld [vmem:[%s232 + $0x4] sm:$0xf]
        %v400 = vld [vmem:[%s232 + $0x8] sm:$0xf]
        %v401 = vld [vmem:[%s232 + $0xc] sm:$0xf]
        %v402 = vld [vmem:[%s232 + $0x10] sm:$0xf]
        %v403 = vld [vmem:[%s232 + $0x14] sm:$0xf]
        %v404 = vld [vmem:[%s232 + $0x18] sm:$0xf]
        %v405 = vld [vmem:[%s232 + $0x1c] sm:$0xf]
        %v406 = vld [vmem:[%s232 + $0x20] sm:$0xf]
        %v407 = vld [vmem:[%s232 + $0x24] sm:$0xf]
        %v408 = vld [vmem:[%s232 + $0x28] sm:$0xf]
        %v409 = vld [vmem:[%s232 + $0x2c] sm:$0xf]
        %v410 = vld [vmem:[%s232 + $0x30] sm:$0xf]
        %v411 = vld [vmem:[%s232 + $0x34] sm:$0xf]
        %v412 = vld [vmem:[%s232 + $0x38] sm:$0xf]
        %v413 = vld [vmem:[%s232 + $0x3c] sm:$0xf]
        %v414 = vld [vmem:[%s232 + $0x40] sm:$0xf]
        %v415 = vld [vmem:[%s232 + $0x44] sm:$0xf]
        %v416 = vld [vmem:[%s232 + $0x48] sm:$0xf]
        %v417 = vld [vmem:[%s232 + $0x4c] sm:$0xf]
        %v418 = vld [vmem:[%s232 + $0x50] sm:$0xf]
        %v419 = vld [vmem:[%s232 + $0x54] sm:$0xf]
        %v420 = vld [vmem:[%s232 + $0x58] sm:$0xf]
        %v421 = vld [vmem:[%s232 + $0x5c] sm:$0xf]
        %v422 = vld [vmem:[%s232 + $0x60] sm:$0xf]
        %v423 = vld [vmem:[%s232 + $0x64] sm:$0xf]
        %v424 = vld [vmem:[%s232 + $0x68] sm:$0xf]
        %v425 = vld [vmem:[%s232 + $0x6c] sm:$0xf]
        %v426 = vld [vmem:[%s232 + $0x70] sm:$0xf]
        %v427 = vld [vmem:[%s232 + $0x74] sm:$0xf]
        %v428 = vld [vmem:[%s232 + $0x78] sm:$0xf]
        %v429 = vld [vmem:[%s232 + $0x7c] sm:$0xf]
        %v430 = vld [vmem:[%s232 + $0x80] sm:$0xf]
        %v431 = vld [vmem:[%s232 + $0x84] sm:$0xf]
        %v432 = vld [vmem:[%s232 + $0x88] sm:$0xf]
        %v433 = vld [vmem:[%s232 + $0x8c] sm:$0xf]
        %v434 = vld [vmem:[%s232 + $0x90] sm:$0xf]
        %v435 = vld [vmem:[%s232 + $0x94] sm:$0xf]
        %v436 = vld [vmem:[%s232 + $0x98] sm:$0xf]
        %v437 = vld [vmem:[%s232 + $0x9c] sm:$0xf]
        %v438 = vld [vmem:[%s232 + $0xa0] sm:$0xf]
        %v439 = vld [vmem:[%s232 + $0xa4] sm:$0xf]
        %v440 = vld [vmem:[%s232 + $0xa8] sm:$0xf]
        %v441 = vld [vmem:[%s232 + $0xac] sm:$0xf]
        %v442 = vld [vmem:[%s232 + $0xb0] sm:$0xf]
        %v443 = vld [vmem:[%s232 + $0xb4] sm:$0xf]
        %v444 = vld [vmem:[%s232 + $0xb8] sm:$0xf]
        %v445 = vld [vmem:[%s232 + $0xbc] sm:$0xf]
        %v446 = vld [vmem:[%s232 + $0xc0] sm:$0xf]
        %v447 = vld [vmem:[%s232 + $0xc4] sm:$0xf]
        %v448 = vld [vmem:[%s232 + $0xc8] sm:$0xf]
        %v449 = vld [vmem:[%s232 + $0xcc] sm:$0xf]
        %v450 = vld [vmem:[%s232 + $0xd0] sm:$0xf]
        %v451 = vld [vmem:[%s232 + $0xd4] sm:$0xf]
        %v452 = vld [vmem:[%s232 + $0xd8] sm:$0xf]
        %v453 = vld [vmem:[%s232 + $0xdc] sm:$0xf]
        %v454 = vld [vmem:[%s232 + $0xe0] sm:$0xf]
        %v455 = vld [vmem:[%s232 + $0xe4] sm:$0xf]
        %v456 = vld [vmem:[%s232 + $0xe8] sm:$0xf]
        %v457 = vld [vmem:[%s232 + $0xec] sm:$0xf]
        %v458 = vld [vmem:[%s232 + $0xf0] sm:$0xf]
        %v459 = vld [vmem:[%s232 + $0xf4] sm:$0xf]
        %v460 = vld [vmem:[%s232 + $0xf8] sm:$0xf]
        %v461 = vld [vmem:[%s232 + $0xfc] sm:$0xf]
        %v462 = vld [vmem:[#allocation2] sm:$0xff]
        %v463 = vld [vmem:[#allocation2 + $0x8] sm:$0xff]
        %v464 = vld [vmem:[#allocation2 + $0x10] sm:$0xff]
        %v529 = vunpack.c.l.b16 %v398
        %v530 = vunpack.c.l.b16 %v399
        %v531 = vunpack.c.l.b16 %v400
        %v532 = vunpack.c.l.b16 %v401
        %v533 = vunpack.c.l.b16 %v402
        %v534 = vunpack.c.l.b16 %v403
        %v535 = vunpack.c.l.b16 %v404
        %v536 = vunpack.c.l.b16 %v405
        %v537 = vunpack.c.l.b16 %v406
        %v538 = vunpack.c.l.b16 %v407
        %v539 = vunpack.c.l.b16 %v408
        %v540 = vunpack.c.l.b16 %v409
        %v541 = vunpack.c.l.b16 %v410
        %v542 = vunpack.c.l.b16 %v411
        %v543 = vunpack.c.l.b16 %v412
        %v544 = vunpack.c.l.b16 %v413
        %v545 = vunpack.c.l.b16 %v414
        %v546 = vunpack.c.l.b16 %v415
        %v547 = vunpack.c.l.b16 %v416
        %v548 = vunpack.c.l.b16 %v417
        %v549 = vunpack.c.l.b16 %v418
        %v550 = vunpack.c.l.b16 %v419
        %v551 = vunpack.c.l.b16 %v420
        %v552 = vunpack.c.l.b16 %v421
        %v553 = vunpack.c.l.b16 %v422
        %v554 = vunpack.c.l.b16 %v423
        %v555 = vunpack.c.l.b16 %v424
        %v556 = vunpack.c.l.b16 %v425
        %v557 = vunpack.c.l.b16 %v426
        %v558 = vunpack.c.l.b16 %v427
        %v559 = vunpack.c.l.b16 %v428
        %v560 = vunpack.c.l.b16 %v429
        %v561 = vunpack.c.l.b16 %v430
        %v562 = vunpack.c.l.b16 %v431
        %v563 = vunpack.c.l.b16 %v432
        %v564 = vunpack.c.l.b16 %v433
        %v565 = vunpack.c.l.b16 %v434
        %v566 = vunpack.c.l.b16 %v435
        %v567 = vunpack.c.l.b16 %v436
        %v568 = vunpack.c.l.b16 %v437
        %v569 = vunpack.c.l.b16 %v438
        %v570 = vunpack.c.l.b16 %v439
        %v571 = vunpack.c.l.b16 %v440
        %v572 = vunpack.c.l.b16 %v441
        %v573 = vunpack.c.l.b16 %v442
        %v574 = vunpack.c.l.b16 %v443
        %v575 = vunpack.c.l.b16 %v444
        %v576 = vunpack.c.l.b16 %v445
        %v577 = vunpack.c.l.b16 %v446
        %v578 = vunpack.c.l.b16 %v447
        %v579 = vunpack.c.l.b16 %v448
        %v580 = vunpack.c.l.b16 %v449
        %v581 = vunpack.c.l.b16 %v450
        %v582 = vunpack.c.l.b16 %v451
        %v583 = vunpack.c.l.b16 %v452
        %v584 = vunpack.c.l.b16 %v453
        %v585 = vunpack.c.l.b16 %v454
        %v586 = vunpack.c.l.b16 %v455
        %v587 = vunpack.c.l.b16 %v456
        %v588 = vunpack.c.l.b16 %v457
        %v589 = vunpack.c.l.b16 %v458
        %v590 = vunpack.c.l.b16 %v459
        %v591 = vunpack.c.l.b16 %v460
        %v592 = vunpack.c.l.b16 %v461
        %v593 = vpack.c.b16 %v530, %v529
        %v594 = vpack.c.b16 %v532, %v531
        %v595 = vpack.c.b16 %v534, %v533
        %v596 = vpack.c.b16 %v536, %v535
        %v597 = vpack.c.b16 %v538, %v537
        %v598 = vpack.c.b16 %v540, %v539
        %v599 = vpack.c.b16 %v542, %v541
        %v600 = vpack.c.b16 %v544, %v543
        %v601 = vpack.c.b16 %v546, %v545
        %v602 = vpack.c.b16 %v548, %v547
        %v603 = vpack.c.b16 %v550, %v549
        %v604 = vpack.c.b16 %v552, %v551
        %v605 = vpack.c.b16 %v554, %v553
        %v606 = vpack.c.b16 %v556, %v555
        %v607 = vpack.c.b16 %v558, %v557
        %v608 = vpack.c.b16 %v560, %v559
        %v609 = vpack.c.b16 %v562, %v561
        %v610 = vpack.c.b16 %v564, %v563
        %v611 = vpack.c.b16 %v566, %v565
        %v612 = vpack.c.b16 %v568, %v567
        %v613 = vpack.c.b16 %v570, %v569
        %v614 = vpack.c.b16 %v572, %v571
        %v615 = vpack.c.b16 %v574, %v573
        %v616 = vpack.c.b16 %v576, %v575
        %v617 = vpack.c.b16 %v578, %v577
        %v618 = vpack.c.b16 %v580, %v579
        %v619 = vpack.c.b16 %v582, %v581
        %v620 = vpack.c.b16 %v584, %v583
        %v621 = vpack.c.b16 %v586, %v585
        %v622 = vpack.c.b16 %v588, %v587
        %v623 = vpack.c.b16 %v590, %v589
        %v624 = vpack.c.b16 %v592, %v591
        %vm625 = vcmask 392192
        %v627 = vsel %vm625, %v593, 0
        %v630 = vsel %vm625, %v594, 0
        %v633 = vsel %vm625, %v595, 0
        %v636 = vsel %vm625, %v596, 0
        %v639 = vsel %vm625, %v597, 0
        %v642 = vsel %vm625, %v598, 0
        %v645 = vsel %vm625, %v599, 0
        %v648 = vsel %vm625, %v600, 0
        %v651 = vsel %vm625, %v601, 0
        %v654 = vsel %vm625, %v602, 0
        %v657 = vsel %vm625, %v603, 0
        %v660 = vsel %vm625, %v604, 0
        %v663 = vsel %vm625, %v605, 0
        %v666 = vsel %vm625, %v606, 0
        %v669 = vsel %vm625, %v607, 0
        %v672 = vsel %vm625, %v608, 0
        %v675 = vsel %vm625, %v609, 0
        %v678 = vsel %vm625, %v610, 0
        %v681 = vsel %vm625, %v611, 0
        %v684 = vsel %vm625, %v612, 0
        %v687 = vsel %vm625, %v613, 0
        %v690 = vsel %vm625, %v614, 0
        %v693 = vsel %vm625, %v615, 0
        %v696 = vsel %vm625, %v616, 0
        %v699 = vsel %vm625, %v617, 0
        %v702 = vsel %vm625, %v618, 0
        %v705 = vsel %vm625, %v619, 0
        %v708 = vsel %vm625, %v620, 0
        %v711 = vsel %vm625, %v621, 0
        %v714 = vsel %vm625, %v622, 0
        %v717 = vsel %vm625, %v623, 0
        %v720 = vsel %vm625, %v624, 0
        %722 = vmatprep.subr.bf16.mxu0 0
        %723 = vmatpush1.bf16.msra.mxu0 %v462
        %724 = vmatprep.subr.bf16.mxu0 0
        %725 = vmatpush1.bf16.msra.mxu0 %v463
        %726 = vmatprep.subr.bf16.mxu0 0
        %727 = vmatpush1.bf16.msra.mxu0 %v464
        %728 = vmatprep.subr.bf16.mxu0 0
        %729 = vmatpush1.bf16.msra.mxu0 0
        %730 = vmatprep.subr.bf16.mxu0 0
        %731 = vmatpush1.bf16.msra.mxu0 0
        %732 = vmatprep.subr.bf16.mxu0 0
        %733 = vmatpush1.bf16.msra.mxu0 0
        %734 = vmatprep.subr.bf16.mxu0 0
        %735 = vmatpush1.bf16.msra.mxu0 0
        %736 = vmatprep.subr.bf16.mxu0 0
        %737 = vmatpush1.bf16.msra.mxu0 0
        %738 = vmatprep.subr.bf16.mxu0 0
        %739 = vmatpush1.bf16.msra.mxu0 0
        %740 = vmatprep.subr.bf16.mxu0 0
        %741 = vmatpush1.bf16.msra.mxu0 0
        %742 = vmatprep.subr.bf16.mxu0 0
        %743 = vmatpush1.bf16.msra.mxu0 0
        %744 = vmatprep.subr.bf16.mxu0 0
        %745 = vmatpush1.bf16.msra.mxu0 0
        %746 = vmatprep.subr.bf16.mxu0 0
        %747 = vmatpush1.bf16.msra.mxu0 0
        %748 = vmatprep.subr.bf16.mxu0 0
        %749 = vmatpush1.bf16.msra.mxu0 0
        %750 = vmatprep.subr.bf16.mxu0 0
        %751 = vmatpush1.bf16.msra.mxu0 0
        %752 = vmatprep.subr.bf16.mxu0 0
        %753 = vmatpush1.bf16.msra.mxu0 0
        %754 = vmatprep.mubr.bf16.mxu0 0
        %755 = vmatmul.mubr.bf16.gmra.mrb[0].mxu0 %v627
        %v756 = vpop.f32.mrb[0].mxu0
        %v757 = vadd.f32 0.0, %v756
        %v758 = vpop.f32.mrb[0].mxu0
        %v759 = vpop.f32.mrb[0].mxu0
        %v760 = vadd.f32 0.0, %v759
        %v761 = vpop.f32.mrb[0].mxu0
        %762 = vmatprep.mubr.bf16.mxu0 0
        %763 = vmatmul.mubr.bf16.gmra.mrb[0].mxu0 %v630
        %v764 = vpop.f32.mrb[0].mxu0
        %v765 = vadd.f32 0.0, %v764
        %v766 = vpop.f32.mrb[0].mxu0
        %v767 = vpop.f32.mrb[0].mxu0
        %v768 = vadd.f32 0.0, %v767
        %v769 = vpop.f32.mrb[0].mxu0
        %770 = vmatprep.mubr.bf16.mxu0 0
        %771 = vmatmul.mubr.bf16.gmra.mrb[0].mxu0 %v633
        %v772 = vpop.f32.mrb[0].mxu0
        %v773 = vadd.f32 0.0, %v772
        %v774 = vpop.f32.mrb[0].mxu0
        %v775 = vpop.f32.mrb[0].mxu0
        %v776 = vadd.f32 0.0, %v775
        %v777 = vpop.f32.mrb[0].mxu0
        %778 = vmatprep.mubr.bf16.mxu0 0
        %779 = vmatmul.mubr.bf16.gmra.mrb[0].mxu0 %v636
        %v780 = vpop.f32.mrb[0].mxu0
        %v781 = vadd.f32 0.0, %v780
        %v782 = vpop.f32.mrb[0].mxu0
        %v783 = vpop.f32.mrb[0].mxu0
        %v784 = vadd.f32 0.0, %v783
        %v785 = vpop.f32.mrb[0].mxu0
        %786 = vmatprep.mubr.bf16.mxu0 0
        %787 = vmatmul.mubr.bf16.gmra.mrb[0].mxu0 %v639
        %v788 = vpop.f32.mrb[0].mxu0
        %v789 = vadd.f32 0.0, %v788
        %v790 = vpop.f32.mrb[0].mxu0
        %v791 = vpop.f32.mrb[0].mxu0
        %v792 = vadd.f32 0.0, %v791
        %v793 = vpop.f32.mrb[0].mxu0
        %794 = vmatprep.mubr.bf16.mxu0 0
        %795 = vmatmul.mubr.bf16.gmra.mrb[0].mxu0 %v642
        %v796 = vpop.f32.mrb[0].mxu0
        %v797 = vadd.f32 0.0, %v796
        %v798 = vpop.f32.mrb[0].mxu0
        %v799 = vpop.f32.mrb[0].mxu0
        %v800 = vadd.f32 0.0, %v799
        %v801 = vpop.f32.mrb[0].mxu0
        %802 = vmatprep.mubr.bf16.mxu0 0
        %803 = vmatmul.mubr.bf16.gmra.mrb[0].mxu0 %v645
        %v804 = vpop.f32.mrb[0].mxu0
        %v805 = vadd.f32 0.0, %v804
        %v806 = vpop.f32.mrb[0].mxu0
        %v807 = vpop.f32.mrb[0].mxu0
        %v808 = vadd.f32 0.0, %v807
        %v809 = vpop.f32.mrb[0].mxu0
        %810 = vmatprep.mubr.bf16.mxu0 0
        %811 = vmatmul.mubr.bf16.gmra.mrb[0].mxu0 %v648
        %v812 = vpop.f32.mrb[0].mxu0
        %v813 = vadd.f32 0.0, %v812
        %v814 = vpop.f32.mrb[0].mxu0
        %v815 = vpop.f32.mrb[0].mxu0
        %v816 = vadd.f32 0.0, %v815
        %v817 = vpop.f32.mrb[0].mxu0
        %818 = vmatprep.mubr.bf16.mxu0 0
        %819 = vmatmul.mubr.bf16.gmra.mrb[0].mxu0 %v651
        %v820 = vpop.f32.mrb[0].mxu0
        %v821 = vadd.f32 0.0, %v820
        %v822 = vpop.f32.mrb[0].mxu0
        %v823 = vpop.f32.mrb[0].mxu0
        %v824 = vadd.f32 0.0, %v823
        %v825 = vpop.f32.mrb[0].mxu0
        %826 = vmatprep.mubr.bf16.mxu0 0
        %827 = vmatmul.mubr.bf16.gmra.mrb[0].mxu0 %v654
        %v828 = vpop.f32.mrb[0].mxu0
        %v829 = vadd.f32 0.0, %v828
        %v830 = vpop.f32.mrb[0].mxu0
        %v831 = vpop.f32.mrb[0].mxu0
        %v832 = vadd.f32 0.0, %v831
        %v833 = vpop.f32.mrb[0].mxu0
        %834 = vmatprep.mubr.bf16.mxu0 0
        %835 = vmatmul.mubr.bf16.gmra.mrb[0].mxu0 %v657
        %v836 = vpop.f32.mrb[0].mxu0
        %v837 = vadd.f32 0.0, %v836
        %v838 = vpop.f32.mrb[0].mxu0
        %v839 = vpop.f32.mrb[0].mxu0
        %v840 = vadd.f32 0.0, %v839
        %v841 = vpop.f32.mrb[0].mxu0
        %842 = vmatprep.mubr.bf16.mxu0 0
        %843 = vmatmul.mubr.bf16.gmra.mrb[0].mxu0 %v660
        %v844 = vpop.f32.mrb[0].mxu0
        %v845 = vadd.f32 0.0, %v844
        %v846 = vpop.f32.mrb[0].mxu0
        %v847 = vpop.f32.mrb[0].mxu0
        %v848 = vadd.f32 0.0, %v847
        %v849 = vpop.f32.mrb[0].mxu0
        %850 = vmatprep.mubr.bf16.mxu0 0
        %851 = vmatmul.mubr.bf16.gmra.mrb[0].mxu0 %v663
        %v852 = vpop.f32.mrb[0].mxu0
        %v853 = vadd.f32 0.0, %v852
        %v854 = vpop.f32.mrb[0].mxu0
        %v855 = vpop.f32.mrb[0].mxu0
        %v856 = vadd.f32 0.0, %v855
        %v857 = vpop.f32.mrb[0].mxu0
        %858 = vmatprep.mubr.bf16.mxu0 0
        %859 = vmatmul.mubr.bf16.gmra.mrb[0].mxu0 %v666
        %v860 = vpop.f32.mrb[0].mxu0
        %v861 = vadd.f32 0.0, %v860
        %v862 = vpop.f32.mrb[0].mxu0
        %v863 = vpop.f32.mrb[0].mxu0
        %v864 = vadd.f32 0.0, %v863
        %v865 = vpop.f32.mrb[0].mxu0
        %866 = vmatprep.mubr.bf16.mxu0 0
        %867 = vmatmul.mubr.bf16.gmra.mrb[0].mxu0 %v669
        %v868 = vpop.f32.mrb[0].mxu0
        %v869 = vadd.f32 0.0, %v868
        %v870 = vpop.f32.mrb[0].mxu0
        %v871 = vpop.f32.mrb[0].mxu0
        %v872 = vadd.f32 0.0, %v871
        %v873 = vpop.f32.mrb[0].mxu0
        %874 = vmatprep.mubr.bf16.mxu0 0
        %875 = vmatmul.mubr.bf16.gmra.mrb[0].mxu0 %v672
        %v876 = vpop.f32.mrb[0].mxu0
        %v877 = vadd.f32 0.0, %v876
        %v878 = vpop.f32.mrb[0].mxu0
        %v879 = vpop.f32.mrb[0].mxu0
        %v880 = vadd.f32 0.0, %v879
        %v881 = vpop.f32.mrb[0].mxu0
        %882 = vmatprep.mubr.bf16.mxu0 0
        %883 = vmatmul.mubr.bf16.gmra.mrb[0].mxu0 %v675
        %v884 = vpop.f32.mrb[0].mxu0
        %v885 = vadd.f32 0.0, %v884
        %v886 = vpop.f32.mrb[0].mxu0
        %v887 = vpop.f32.mrb[0].mxu0
        %v888 = vadd.f32 0.0, %v887
        %v889 = vpop.f32.mrb[0].mxu0
        %890 = vmatprep.mubr.bf16.mxu0 0
        %891 = vmatmul.mubr.bf16.gmra.mrb[0].mxu0 %v678
        %v892 = vpop.f32.mrb[0].mxu0
        %v893 = vadd.f32 0.0, %v892
        %v894 = vpop.f32.mrb[0].mxu0
        %v895 = vpop.f32.mrb[0].mxu0
        %v896 = vadd.f32 0.0, %v895
        %v897 = vpop.f32.mrb[0].mxu0
        %898 = vmatprep.mubr.bf16.mxu0 0
        %899 = vmatmul.mubr.bf16.gmra.mrb[0].mxu0 %v681
        %v900 = vpop.f32.mrb[0].mxu0
        %v901 = vadd.f32 0.0, %v900
        %v902 = vpop.f32.mrb[0].mxu0
        %v903 = vpop.f32.mrb[0].mxu0
        %v904 = vadd.f32 0.0, %v903
        %v905 = vpop.f32.mrb[0].mxu0
        %906 = vmatprep.mubr.bf16.mxu0 0
        %907 = vmatmul.mubr.bf16.gmra.mrb[0].mxu0 %v684
        %v908 = vpop.f32.mrb[0].mxu0
        %v909 = vadd.f32 0.0, %v908
        %v910 = vpop.f32.mrb[0].mxu0
        %v911 = vpop.f32.mrb[0].mxu0
        %v912 = vadd.f32 0.0, %v911
        %v913 = vpop.f32.mrb[0].mxu0
        %914 = vmatprep.mubr.bf16.mxu0 0
        %915 = vmatmul.mubr.bf16.gmra.mrb[0].mxu0 %v687
        %v916 = vpop.f32.mrb[0].mxu0
        %v917 = vadd.f32 0.0, %v916
        %v918 = vpop.f32.mrb[0].mxu0
        %v919 = vpop.f32.mrb[0].mxu0
        %v920 = vadd.f32 0.0, %v919
        %v921 = vpop.f32.mrb[0].mxu0
        %922 = vmatprep.mubr.bf16.mxu0 0
        %923 = vmatmul.mubr.bf16.gmra.mrb[0].mxu0 %v690
        %v924 = vpop.f32.mrb[0].mxu0
        %v925 = vadd.f32 0.0, %v924
        %v926 = vpop.f32.mrb[0].mxu0
        %v927 = vpop.f32.mrb[0].mxu0
        %v928 = vadd.f32 0.0, %v927
        %v929 = vpop.f32.mrb[0].mxu0
        %930 = vmatprep.mubr.bf16.mxu0 0
        %931 = vmatmul.mubr.bf16.gmra.mrb[0].mxu0 %v693
        %v932 = vpop.f32.mrb[0].mxu0
        %v933 = vadd.f32 0.0, %v932
        %v934 = vpop.f32.mrb[0].mxu0
        %v935 = vpop.f32.mrb[0].mxu0
        %v936 = vadd.f32 0.0, %v935
        %v937 = vpop.f32.mrb[0].mxu0
        %938 = vmatprep.mubr.bf16.mxu0 0
        %939 = vmatmul.mubr.bf16.gmra.mrb[0].mxu0 %v696
        %v940 = vpop.f32.mrb[0].mxu0
        %v941 = vadd.f32 0.0, %v940
        %v942 = vpop.f32.mrb[0].mxu0
        %v943 = vpop.f32.mrb[0].mxu0
        %v944 = vadd.f32 0.0, %v943
        %v945 = vpop.f32.mrb[0].mxu0
        %946 = vmatprep.mubr.bf16.mxu0 0
        %947 = vmatmul.mubr.bf16.gmra.mrb[0].mxu0 %v699
        %v948 = vpop.f32.mrb[0].mxu0
        %v949 = vadd.f32 0.0, %v948
        %v950 = vpop.f32.mrb[0].mxu0
        %v951 = vpop.f32.mrb[0].mxu0
        %v952 = vadd.f32 0.0, %v951
        %v953 = vpop.f32.mrb[0].mxu0
        %954 = vmatprep.mubr.bf16.mxu0 0
        %955 = vmatmul.mubr.bf16.gmra.mrb[0].mxu0 %v702
        %v956 = vpop.f32.mrb[0].mxu0
        %v957 = vadd.f32 0.0, %v956
        %v958 = vpop.f32.mrb[0].mxu0
        %v959 = vpop.f32.mrb[0].mxu0
        %v960 = vadd.f32 0.0, %v959
        %v961 = vpop.f32.mrb[0].mxu0
        %962 = vmatprep.mubr.bf16.mxu0 0
        %963 = vmatmul.mubr.bf16.gmra.mrb[0].mxu0 %v705
        %v964 = vpop.f32.mrb[0].mxu0
        %v965 = vadd.f32 0.0, %v964
        %v966 = vpop.f32.mrb[0].mxu0
        %v967 = vpop.f32.mrb[0].mxu0
        %v968 = vadd.f32 0.0, %v967
        %v969 = vpop.f32.mrb[0].mxu0
        %970 = vmatprep.mubr.bf16.mxu0 0
        %971 = vmatmul.mubr.bf16.gmra.mrb[0].mxu0 %v708
        %v972 = vpop.f32.mrb[0].mxu0
        %v973 = vadd.f32 0.0, %v972
        %v974 = vpop.f32.mrb[0].mxu0
        %v975 = vpop.f32.mrb[0].mxu0
        %v976 = vadd.f32 0.0, %v975
        %v977 = vpop.f32.mrb[0].mxu0
        %978 = vmatprep.mubr.bf16.mxu0 0
        %979 = vmatmul.mubr.bf16.gmra.mrb[0].mxu0 %v711
        %v980 = vpop.f32.mrb[0].mxu0
        %v981 = vadd.f32 0.0, %v980
        %v982 = vpop.f32.mrb[0].mxu0
        %v983 = vpop.f32.mrb[0].mxu0
        %v984 = vadd.f32 0.0, %v983
        %v985 = vpop.f32.mrb[0].mxu0
        %986 = vmatprep.mubr.bf16.mxu0 0
        %987 = vmatmul.mubr.bf16.gmra.mrb[0].mxu0 %v714
        %v988 = vpop.f32.mrb[0].mxu0
        %v989 = vadd.f32 0.0, %v988
        %v990 = vpop.f32.mrb[0].mxu0
        %v991 = vpop.f32.mrb[0].mxu0
        %v992 = vadd.f32 0.0, %v991
        %v993 = vpop.f32.mrb[0].mxu0
        %994 = vmatprep.mubr.bf16.mxu0 0
        %995 = vmatmul.mubr.bf16.gmra.mrb[0].mxu0 %v717
        %v996 = vpop.f32.mrb[0].mxu0
        %v997 = vadd.f32 0.0, %v996
        %v998 = vpop.f32.mrb[0].mxu0
        %v999 = vpop.f32.mrb[0].mxu0
        %v1000 = vadd.f32 0.0, %v999
        %v1001 = vpop.f32.mrb[0].mxu0
        %1002 = vmatprep.mubr.bf16.mxu0 0
        %1003 = vmatmul.mubr.bf16.gmra.mrb[0].mxu0 %v720
        %v1004 = vpop.f32.mrb[0].mxu0
        %v1005 = vadd.f32 0.0, %v1004
        %v1006 = vpop.f32.mrb[0].mxu0
        %v1007 = vpop.f32.mrb[0].mxu0
        %v1008 = vadd.f32 0.0, %v1007
        %v1009 = vpop.f32.mrb[0].mxu0
        %1010 = vdwg.mxu0
        %v1011 = vlaneseq
        %v1012 = vshrl.u32 %v1011, 7
        %v1013 = vadd.s32 %v1012, 8
        %v1014 = vadd.s32 %v1012, 16
        %v1015 = vadd.s32 %v1012, 24
        %v1016 = vadd.s32 %v1012, 32
        %v1017 = vadd.s32 %v1012, 40
        %v1018 = vadd.s32 %v1012, 48
        %v1019 = vadd.s32 %v1012, 56
        %v1020 = vadd.s32 %v1012, 64
        %v1021 = vadd.s32 %v1012, 72
        %v1022 = vadd.s32 %v1012, 80
        %v1023 = vadd.s32 %v1012, 88
        %v1024 = vadd.s32 %v1012, 96
        %v1025 = vadd.s32 %v1012, 104
        %v1026 = vadd.s32 %v1012, 112
        %v1027 = vadd.s32 %v1012, 120
        %v1028 = vadd.s32 %v1012, 128
        %v1029 = vadd.s32 %v1012, 136
        %v1030 = vadd.s32 %v1012, 144
        %v1031 = vadd.s32 %v1012, 152
        %v1032 = vadd.s32 %v1012, 160
        %v1033 = vadd.s32 %v1012, 168
        %v1034 = vadd.s32 %v1012, 176
        %v1035 = vadd.s32 %v1012, 184
        %v1036 = vadd.s32 %v1012, 192
        %v1037 = vadd.s32 %v1012, 200
        %v1038 = vadd.s32 %v1012, 208
        %v1039 = vadd.s32 %v1012, 216
        %v1040 = vadd.s32 %v1012, 224
        %v1041 = vadd.s32 %v1012, 232
        %v1042 = vadd.s32 %v1012, 240
        %v1043 = vadd.s32 %v1012, 248
        %v1044 = vadd.s32 %v1012, 256
        %v1045 = vadd.s32 %v1012, 264
        %v1046 = vadd.s32 %v1012, 272
        %v1047 = vadd.s32 %v1012, 280
        %v1048 = vadd.s32 %v1012, 288
        %v1049 = vadd.s32 %v1012, 296
        %v1050 = vadd.s32 %v1012, 304
        %v1051 = vadd.s32 %v1012, 312
        %v1052 = vadd.s32 %v1012, 320
        %v1053 = vadd.s32 %v1012, 328
        %v1054 = vadd.s32 %v1012, 336
        %v1055 = vadd.s32 %v1012, 344
        %v1056 = vadd.s32 %v1012, 352
        %v1057 = vadd.s32 %v1012, 360
        %v1058 = vadd.s32 %v1012, 368
        %v1059 = vadd.s32 %v1012, 376
        %v1060 = vadd.s32 %v1012, 384
        %v1061 = vadd.s32 %v1012, 392
        %v1062 = vadd.s32 %v1012, 400
        %v1063 = vadd.s32 %v1012, 408
        %v1064 = vadd.s32 %v1012, 416
        %v1065 = vadd.s32 %v1012, 424
        %v1066 = vadd.s32 %v1012, 432
        %v1067 = vadd.s32 %v1012, 440
        %v1068 = vadd.s32 %v1012, 448
        %v1069 = vadd.s32 %v1012, 456
        %v1070 = vadd.s32 %v1012, 464
        %v1071 = vadd.s32 %v1012, 472
        %v1072 = vadd.s32 %v1012, 480
        %v1073 = vadd.s32 %v1012, 488
        %v1074 = vadd.s32 %v1012, 496
        %v1075 = vadd.s32 %v1012, 504
        %s1076 = smul.u32 %s21, 512
        %v1077 = vstv %s1076
        %v1078 = vadd.s32 %v1077, %v1012
        %v1079 = vadd.s32 %v1077, %v1013
        %v1080 = vadd.s32 %v1077, %v1014
        %v1081 = vadd.s32 %v1077, %v1015
        %v1082 = vadd.s32 %v1077, %v1016
        %v1083 = vadd.s32 %v1077, %v1017
        %v1084 = vadd.s32 %v1077, %v1018
        %v1085 = vadd.s32 %v1077, %v1019
        %v1086 = vadd.s32 %v1077, %v1020
        %v1087 = vadd.s32 %v1077, %v1021
        %v1088 = vadd.s32 %v1077, %v1022
        %v1089 = vadd.s32 %v1077, %v1023
        %v1090 = vadd.s32 %v1077, %v1024
        %v1091 = vadd.s32 %v1077, %v1025
        %v1092 = vadd.s32 %v1077, %v1026
        %v1093 = vadd.s32 %v1077, %v1027
        %v1094 = vadd.s32 %v1077, %v1028
        %v1095 = vadd.s32 %v1077, %v1029
        %v1096 = vadd.s32 %v1077, %v1030
        %v1097 = vadd.s32 %v1077, %v1031
        %v1098 = vadd.s32 %v1077, %v1032
        %v1099 = vadd.s32 %v1077, %v1033
        %v1100 = vadd.s32 %v1077, %v1034
        %v1101 = vadd.s32 %v1077, %v1035
        %v1102 = vadd.s32 %v1077, %v1036
        %v1103 = vadd.s32 %v1077, %v1037
        %v1104 = vadd.s32 %v1077, %v1038
        %v1105 = vadd.s32 %v1077, %v1039
        %v1106 = vadd.s32 %v1077, %v1040
        %v1107 = vadd.s32 %v1077, %v1041
        %v1108 = vadd.s32 %v1077, %v1042
        %v1109 = vadd.s32 %v1077, %v1043
        %v1110 = vadd.s32 %v1077, %v1044
        %v1111 = vadd.s32 %v1077, %v1045
        %v1112 = vadd.s32 %v1077, %v1046
        %v1113 = vadd.s32 %v1077, %v1047
        %v1114 = vadd.s32 %v1077, %v1048
        %v1115 = vadd.s32 %v1077, %v1049
        %v1116 = vadd.s32 %v1077, %v1050
        %v1117 = vadd.s32 %v1077, %v1051
        %v1118 = vadd.s32 %v1077, %v1052
        %v1119 = vadd.s32 %v1077, %v1053
        %v1120 = vadd.s32 %v1077, %v1054
        %v1121 = vadd.s32 %v1077, %v1055
        %v1122 = vadd.s32 %v1077, %v1056
        %v1123 = vadd.s32 %v1077, %v1057
        %v1124 = vadd.s32 %v1077, %v1058
        %v1125 = vadd.s32 %v1077, %v1059
        %v1126 = vadd.s32 %v1077, %v1060
        %v1127 = vadd.s32 %v1077, %v1061
        %v1128 = vadd.s32 %v1077, %v1062
        %v1129 = vadd.s32 %v1077, %v1063
        %v1130 = vadd.s32 %v1077, %v1064
        %v1131 = vadd.s32 %v1077, %v1065
        %v1132 = vadd.s32 %v1077, %v1066
        %v1133 = vadd.s32 %v1077, %v1067
        %v1134 = vadd.s32 %v1077, %v1068
        %v1135 = vadd.s32 %v1077, %v1069
        %v1136 = vadd.s32 %v1077, %v1070
        %v1137 = vadd.s32 %v1077, %v1071
        %v1138 = vadd.s32 %v1077, %v1072
        %v1139 = vadd.s32 %v1077, %v1073
        %v1140 = vadd.s32 %v1077, %v1074
        %v1141 = vadd.s32 %v1077, %v1075
        %vm1142 = vcmp.lt.s32.totalorder %v1078, 1000
        %vm1143 = vcmp.lt.s32.totalorder %v1079, 1000
        %vm1144 = vcmp.lt.s32.totalorder %v1080, 1000
        %vm1145 = vcmp.lt.s32.totalorder %v1081, 1000
        %vm1146 = vcmp.lt.s32.totalorder %v1082, 1000
        %vm1147 = vcmp.lt.s32.totalorder %v1083, 1000
        %vm1148 = vcmp.lt.s32.totalorder %v1084, 1000
        %vm1149 = vcmp.lt.s32.totalorder %v1085, 1000
        %vm1150 = vcmp.lt.s32.totalorder %v1086, 1000
        %vm1151 = vcmp.lt.s32.totalorder %v1087, 1000
        %vm1152 = vcmp.lt.s32.totalorder %v1088, 1000
        %vm1153 = vcmp.lt.s32.totalorder %v1089, 1000
        %vm1154 = vcmp.lt.s32.totalorder %v1090, 1000
        %vm1155 = vcmp.lt.s32.totalorder %v1091, 1000
        %vm1156 = vcmp.lt.s32.totalorder %v1092, 1000
        %vm1157 = vcmp.lt.s32.totalorder %v1093, 1000
        %vm1158 = vcmp.lt.s32.totalorder %v1094, 1000
        %vm1159 = vcmp.lt.s32.totalorder %v1095, 1000
        %vm1160 = vcmp.lt.s32.totalorder %v1096, 1000
        %vm1161 = vcmp.lt.s32.totalorder %v1097, 1000
        %vm1162 = vcmp.lt.s32.totalorder %v1098, 1000
        %vm1163 = vcmp.lt.s32.totalorder %v1099, 1000
        %vm1164 = vcmp.lt.s32.totalorder %v1100, 1000
        %vm1165 = vcmp.lt.s32.totalorder %v1101, 1000
        %vm1166 = vcmp.lt.s32.totalorder %v1102, 1000
        %vm1167 = vcmp.lt.s32.totalorder %v1103, 1000
        %vm1168 = vcmp.lt.s32.totalorder %v1104, 1000
        %vm1169 = vcmp.lt.s32.totalorder %v1105, 1000
        %vm1170 = vcmp.lt.s32.totalorder %v1106, 1000
        %vm1171 = vcmp.lt.s32.totalorder %v1107, 1000
        %vm1172 = vcmp.lt.s32.totalorder %v1108, 1000
        %vm1173 = vcmp.lt.s32.totalorder %v1109, 1000
        %vm1174 = vcmp.lt.s32.totalorder %v1110, 1000
        %vm1175 = vcmp.lt.s32.totalorder %v1111, 1000
        %vm1176 = vcmp.lt.s32.totalorder %v1112, 1000
        %vm1177 = vcmp.lt.s32.totalorder %v1113, 1000
        %vm1178 = vcmp.lt.s32.totalorder %v1114, 1000
        %vm1179 = vcmp.lt.s32.totalorder %v1115, 1000
        %vm1180 = vcmp.lt.s32.totalorder %v1116, 1000
        %vm1181 = vcmp.lt.s32.totalorder %v1117, 1000
        %vm1182 = vcmp.lt.s32.totalorder %v1118, 1000
        %vm1183 = vcmp.lt.s32.totalorder %v1119, 1000
        %vm1184 = vcmp.lt.s32.totalorder %v1120, 1000
        %vm1185 = vcmp.lt.s32.totalorder %v1121, 1000
        %vm1186 = vcmp.lt.s32.totalorder %v1122, 1000
        %vm1187 = vcmp.lt.s32.totalorder %v1123, 1000
        %vm1188 = vcmp.lt.s32.totalorder %v1124, 1000
        %vm1189 = vcmp.lt.s32.totalorder %v1125, 1000
        %vm1190 = vcmp.lt.s32.totalorder %v1126, 1000
        %vm1191 = vcmp.lt.s32.totalorder %v1127, 1000
        %vm1192 = vcmp.lt.s32.totalorder %v1128, 1000
        %vm1193 = vcmp.lt.s32.totalorder %v1129, 1000
        %vm1194 = vcmp.lt.s32.totalorder %v1130, 1000
        %vm1195 = vcmp.lt.s32.totalorder %v1131, 1000
        %vm1196 = vcmp.lt.s32.totalorder %v1132, 1000
        %vm1197 = vcmp.lt.s32.totalorder %v1133, 1000
        %vm1198 = vcmp.lt.s32.totalorder %v1134, 1000
        %vm1199 = vcmp.lt.s32.totalorder %v1135, 1000
        %vm1200 = vcmp.lt.s32.totalorder %v1136, 1000
        %vm1201 = vcmp.lt.s32.totalorder %v1137, 1000
        %vm1202 = vcmp.lt.s32.totalorder %v1138, 1000
        %vm1203 = vcmp.lt.s32.totalorder %v1139, 1000
        %vm1204 = vcmp.lt.s32.totalorder %v1140, 1000
        %vm1205 = vcmp.lt.s32.totalorder %v1141, 1000
        %v1206 = vsel %vm1142, 1, 0
        %v1207 = vsel %vm1143, 1, 0
        %v1208 = vsel %vm1144, 1, 0
        %v1209 = vsel %vm1145, 1, 0
        %v1210 = vsel %vm1146, 1, 0
        %v1211 = vsel %vm1147, 1, 0
        %v1212 = vsel %vm1148, 1, 0
        %v1213 = vsel %vm1149, 1, 0
        %v1214 = vsel %vm1150, 1, 0
        %v1215 = vsel %vm1151, 1, 0
        %v1216 = vsel %vm1152, 1, 0
        %v1217 = vsel %vm1153, 1, 0
        %v1218 = vsel %vm1154, 1, 0
        %v1219 = vsel %vm1155, 1, 0
        %v1220 = vsel %vm1156, 1, 0
        %v1221 = vsel %vm1157, 1, 0
        %v1222 = vsel %vm1158, 1, 0
        %v1223 = vsel %vm1159, 1, 0
        %v1224 = vsel %vm1160, 1, 0
        %v1225 = vsel %vm1161, 1, 0
        %v1226 = vsel %vm1162, 1, 0
        %v1227 = vsel %vm1163, 1, 0
        %v1228 = vsel %vm1164, 1, 0
        %v1229 = vsel %vm1165, 1, 0
        %v1230 = vsel %vm1166, 1, 0
        %v1231 = vsel %vm1167, 1, 0
        %v1232 = vsel %vm1168, 1, 0
        %v1233 = vsel %vm1169, 1, 0
        %v1234 = vsel %vm1170, 1, 0
        %v1235 = vsel %vm1171, 1, 0
        %v1236 = vsel %vm1172, 1, 0
        %v1237 = vsel %vm1173, 1, 0
        %v1238 = vsel %vm1174, 1, 0
        %v1239 = vsel %vm1175, 1, 0
        %v1240 = vsel %vm1176, 1, 0
        %v1241 = vsel %vm1177, 1, 0
        %v1242 = vsel %vm1178, 1, 0
        %v1243 = vsel %vm1179, 1, 0
        %v1244 = vsel %vm1180, 1, 0
        %v1245 = vsel %vm1181, 1, 0
        %v1246 = vsel %vm1182, 1, 0
        %v1247 = vsel %vm1183, 1, 0
        %v1248 = vsel %vm1184, 1, 0
        %v1249 = vsel %vm1185, 1, 0
        %v1250 = vsel %vm1186, 1, 0
        %v1251 = vsel %vm1187, 1, 0
        %v1252 = vsel %vm1188, 1, 0
        %v1253 = vsel %vm1189, 1, 0
        %v1254 = vsel %vm1190, 1, 0
        %v1255 = vsel %vm1191, 1, 0
        %v1256 = vsel %vm1192, 1, 0
        %v1257 = vsel %vm1193, 1, 0
        %v1258 = vsel %vm1194, 1, 0
        %v1259 = vsel %vm1195, 1, 0
        %v1260 = vsel %vm1196, 1, 0
        %v1261 = vsel %vm1197, 1, 0
        %v1262 = vsel %vm1198, 1, 0
        %v1263 = vsel %vm1199, 1, 0
        %v1264 = vsel %vm1200, 1, 0
        %v1265 = vsel %vm1201, 1, 0
        %v1266 = vsel %vm1202, 1, 0
        %v1267 = vsel %vm1203, 1, 0
        %v1268 = vsel %vm1204, 1, 0
        %v1269 = vsel %vm1205, 1, 0
        %vm1270 = vcmp.eq.s32.totalorder %v1206, 1
        %vm1271 = vcmp.eq.s32.totalorder %v1207, 1
        %vm1272 = vcmp.eq.s32.totalorder %v1208, 1
        %vm1273 = vcmp.eq.s32.totalorder %v1209, 1
        %vm1274 = vcmp.eq.s32.totalorder %v1210, 1
        %vm1275 = vcmp.eq.s32.totalorder %v1211, 1
        %vm1276 = vcmp.eq.s32.totalorder %v1212, 1
        %vm1277 = vcmp.eq.s32.totalorder %v1213, 1
        %vm1278 = vcmp.eq.s32.totalorder %v1214, 1
        %vm1279 = vcmp.eq.s32.totalorder %v1215, 1
        %vm1280 = vcmp.eq.s32.totalorder %v1216, 1
        %vm1281 = vcmp.eq.s32.totalorder %v1217, 1
        %vm1282 = vcmp.eq.s32.totalorder %v1218, 1
        %vm1283 = vcmp.eq.s32.totalorder %v1219, 1
        %vm1284 = vcmp.eq.s32.totalorder %v1220, 1
        %vm1285 = vcmp.eq.s32.totalorder %v1221, 1
        %vm1286 = vcmp.eq.s32.totalorder %v1222, 1
        %vm1287 = vcmp.eq.s32.totalorder %v1223, 1
        %vm1288 = vcmp.eq.s32.totalorder %v1224, 1
        %vm1289 = vcmp.eq.s32.totalorder %v1225, 1
        %vm1290 = vcmp.eq.s32.totalorder %v1226, 1
        %vm1291 = vcmp.eq.s32.totalorder %v1227, 1
        %vm1292 = vcmp.eq.s32.totalorder %v1228, 1
        %vm1293 = vcmp.eq.s32.totalorder %v1229, 1
        %vm1294 = vcmp.eq.s32.totalorder %v1230, 1
        %vm1295 = vcmp.eq.s32.totalorder %v1231, 1
        %vm1296 = vcmp.eq.s32.totalorder %v1232, 1
        %vm1297 = vcmp.eq.s32.totalorder %v1233, 1
        %vm1298 = vcmp.eq.s32.totalorder %v1234, 1
        %vm1299 = vcmp.eq.s32.totalorder %v1235, 1
        %vm1300 = vcmp.eq.s32.totalorder %v1236, 1
        %vm1301 = vcmp.eq.s32.totalorder %v1237, 1
        %vm1302 = vcmp.eq.s32.totalorder %v1238, 1
        %vm1303 = vcmp.eq.s32.totalorder %v1239, 1
        %vm1304 = vcmp.eq.s32.totalorder %v1240, 1
        %vm1305 = vcmp.eq.s32.totalorder %v1241, 1
        %vm1306 = vcmp.eq.s32.totalorder %v1242, 1
        %vm1307 = vcmp.eq.s32.totalorder %v1243, 1
        %vm1308 = vcmp.eq.s32.totalorder %v1244, 1
        %vm1309 = vcmp.eq.s32.totalorder %v1245, 1
        %vm1310 = vcmp.eq.s32.totalorder %v1246, 1
        %vm1311 = vcmp.eq.s32.totalorder %v1247, 1
        %vm1312 = vcmp.eq.s32.totalorder %v1248, 1
        %vm1313 = vcmp.eq.s32.totalorder %v1249, 1
        %vm1314 = vcmp.eq.s32.totalorder %v1250, 1
        %vm1315 = vcmp.eq.s32.totalorder %v1251, 1
        %vm1316 = vcmp.eq.s32.totalorder %v1252, 1
        %vm1317 = vcmp.eq.s32.totalorder %v1253, 1
        %vm1318 = vcmp.eq.s32.totalorder %v1254, 1
        %vm1319 = vcmp.eq.s32.totalorder %v1255, 1
        %vm1320 = vcmp.eq.s32.totalorder %v1256, 1
        %vm1321 = vcmp.eq.s32.totalorder %v1257, 1
        %vm1322 = vcmp.eq.s32.totalorder %v1258, 1
        %vm1323 = vcmp.eq.s32.totalorder %v1259, 1
        %vm1324 = vcmp.eq.s32.totalorder %v1260, 1
        %vm1325 = vcmp.eq.s32.totalorder %v1261, 1
        %vm1326 = vcmp.eq.s32.totalorder %v1262, 1
        %vm1327 = vcmp.eq.s32.totalorder %v1263, 1
        %vm1328 = vcmp.eq.s32.totalorder %v1264, 1
        %vm1329 = vcmp.eq.s32.totalorder %v1265, 1
        %vm1330 = vcmp.eq.s32.totalorder %v1266, 1
        %vm1331 = vcmp.eq.s32.totalorder %v1267, 1
        %vm1332 = vcmp.eq.s32.totalorder %v1268, 1
        %vm1333 = vcmp.eq.s32.totalorder %v1269, 1
        %v1334 = vsel %vm1270, %v757, -inf
        %v1335 = vsel %vm1271, %v760, -inf
        %v1336 = vsel %vm1272, %v765, -inf
        %v1337 = vsel %vm1273, %v768, -inf
        %v1338 = vsel %vm1274, %v773, -inf
        %v1339 = vsel %vm1275, %v776, -inf
        %v1340 = vsel %vm1276, %v781, -inf
        %v1341 = vsel %vm1277, %v784, -inf
        %v1342 = vsel %vm1278, %v789, -inf
        %v1343 = vsel %vm1279, %v792, -inf
        %v1344 = vsel %vm1280, %v797, -inf
        %v1345 = vsel %vm1281, %v800, -inf
        %v1346 = vsel %vm1282, %v805, -inf
        %v1347 = vsel %vm1283, %v808, -inf
        %v1348 = vsel %vm1284, %v813, -inf
        %v1349 = vsel %vm1285, %v816, -inf
        %v1350 = vsel %vm1286, %v821, -inf
        %v1351 = vsel %vm1287, %v824, -inf
        %v1352 = vsel %vm1288, %v829, -inf
        %v1353 = vsel %vm1289, %v832, -inf
        %v1354 = vsel %vm1290, %v837, -inf
        %v1355 = vsel %vm1291, %v840, -inf
        %v1356 = vsel %vm1292, %v845, -inf
        %v1357 = vsel %vm1293, %v848, -inf
        %v1358 = vsel %vm1294, %v853, -inf
        %v1359 = vsel %vm1295, %v856, -inf
        %v1360 = vsel %vm1296, %v861, -inf
        %v1361 = vsel %vm1297, %v864, -inf
        %v1362 = vsel %vm1298, %v869, -inf
        %v1363 = vsel %vm1299, %v872, -inf
        %v1364 = vsel %vm1300, %v877, -inf
        %v1365 = vsel %vm1301, %v880, -inf
        %v1366 = vsel %vm1302, %v885, -inf
        %v1367 = vsel %vm1303, %v888, -inf
        %v1368 = vsel %vm1304, %v893, -inf
        %v1369 = vsel %vm1305, %v896, -inf
        %v1370 = vsel %vm1306, %v901, -inf
        %v1371 = vsel %vm1307, %v904, -inf
        %v1372 = vsel %vm1308, %v909, -inf
        %v1373 = vsel %vm1309, %v912, -inf
        %v1374 = vsel %vm1310, %v917, -inf
        %v1375 = vsel %vm1311, %v920, -inf
        %v1376 = vsel %vm1312, %v925, -inf
        %v1377 = vsel %vm1313, %v928, -inf
        %v1378 = vsel %vm1314, %v933, -inf
        %v1379 = vsel %vm1315, %v936, -inf
        %v1380 = vsel %vm1316, %v941, -inf
        %v1381 = vsel %vm1317, %v944, -inf
        %v1382 = vsel %vm1318, %v949, -inf
        %v1383 = vsel %vm1319, %v952, -inf
        %v1384 = vsel %vm1320, %v957, -inf
        %v1385 = vsel %vm1321, %v960, -inf
        %v1386 = vsel %vm1322, %v965, -inf
        %v1387 = vsel %vm1323, %v968, -inf
        %v1388 = vsel %vm1324, %v973, -inf
        %v1389 = vsel %vm1325, %v976, -inf
        %v1390 = vsel %vm1326, %v981, -inf
        %v1391 = vsel %vm1327, %v984, -inf
        %v1392 = vsel %vm1328, %v989, -inf
        %v1393 = vsel %vm1329, %v992, -inf
        %v1394 = vsel %vm1330, %v997, -inf
        %v1395 = vsel %vm1331, %v1000, -inf
        %v1396 = vsel %vm1332, %v1005, -inf
        %v1397 = vsel %vm1333, %v1008, -inf
        %v1398 = vld [vmem:[#allocation3] sm:$0x1]
        %v1399 = vmax.f32 %v1334, %v1338
        %v1400 = vmax.f32 %v1335, %v1339
        %v1401 = vmax.f32 %v1336, %v1340
        %v1402 = vmax.f32 %v1337, %v1341
        %v1403 = vmax.f32 %v1399, %v1342
        %v1404 = vmax.f32 %v1400, %v1343
        %v1405 = vmax.f32 %v1401, %v1344
        %v1406 = vmax.f32 %v1402, %v1345
        %v1407 = vmax.f32 %v1403, %v1346
        %v1408 = vmax.f32 %v1404, %v1347
        %v1409 = vmax.f32 %v1405, %v1348
        %v1410 = vmax.f32 %v1406, %v1349
        %v1411 = vmax.f32 %v1407, %v1350
        %v1412 = vmax.f32 %v1408, %v1351
        %v1413 = vmax.f32 %v1409, %v1352
        %v1414 = vmax.f32 %v1410, %v1353
        %v1415 = vmax.f32 %v1411, %v1354
        %v1416 = vmax.f32 %v1412, %v1355
        %v1417 = vmax.f32 %v1413, %v1356
        %v1418 = vmax.f32 %v1414, %v1357
        %v1419 = vmax.f32 %v1415, %v1358
        %v1420 = vmax.f32 %v1416, %v1359
        %v1421 = vmax.f32 %v1417, %v1360
        %v1422 = vmax.f32 %v1418, %v1361
        %v1423 = vmax.f32 %v1419, %v1362
        %v1424 = vmax.f32 %v1420, %v1363
        %v1425 = vmax.f32 %v1421, %v1364
        %v1426 = vmax.f32 %v1422, %v1365
        %v1427 = vmax.f32 %v1423, %v1366
        %v1428 = vmax.f32 %v1424, %v1367
        %v1429 = vmax.f32 %v1425, %v1368
        %v1430 = vmax.f32 %v1426, %v1369
        %v1431 = vmax.f32 %v1427, %v1370
        %v1432 = vmax.f32 %v1428, %v1371
        %v1433 = vmax.f32 %v1429, %v1372
        %v1434 = vmax.f32 %v1430, %v1373
        %v1435 = vmax.f32 %v1431, %v1374
        %v1436 = vmax.f32 %v1432, %v1375
        %v1437 = vmax.f32 %v1433, %v1376
        %v1438 = vmax.f32 %v1434, %v1377
        %v1439 = vmax.f32 %v1435, %v1378
        %v1440 = vmax.f32 %v1436, %v1379
        %v1441 = vmax.f32 %v1437, %v1380
        %v1442 = vmax.f32 %v1438, %v1381
        %v1443 = vmax.f32 %v1439, %v1382
        %v1444 = vmax.f32 %v1440, %v1383
        %v1445 = vmax.f32 %v1441, %v1384
        %v1446 = vmax.f32 %v1442, %v1385
        %v1447 = vmax.f32 %v1443, %v1386
        %v1448 = vmax.f32 %v1444, %v1387
        %v1449 = vmax.f32 %v1445, %v1388
        %v1450 = vmax.f32 %v1446, %v1389
        %v1451 = vmax.f32 %v1447, %v1390
        %v1452 = vmax.f32 %v1448, %v1391
        %v1453 = vmax.f32 %v1449, %v1392
        %v1454 = vmax.f32 %v1450, %v1393
        %v1455 = vmax.f32 %v1451, %v1394
        %v1456 = vmax.f32 %v1452, %v1395
        %v1457 = vmax.f32 %v1453, %v1396
        %v1458 = vmax.f32 %v1454, %v1397
        %v1459 = vmax.f32 %v1455, %v1456
        %v1460 = vmax.f32 %v1457, %v1458
        %v1461 = vmax.f32 %v1459, %v1460
        %v1462 = vrot.slane %v1461, 4
        %v1463 = vmax.f32 %v1461, %v1462
        %v1464 = vrot.slane %v1463, 2
        %v1465 = vmax.f32 %v1463, %v1464
        %v1466 = vrot.slane %v1465, 1
        %v1467 = vmax.f32 %v1465, %v1466
        %v1468 = vmax.f32 %v1398, %v1467
        %v1470 = vlaneseq
        %v1471 = vshrl.u32 %v1470, 7
        %v1472 = vsub.s32 0, %v1471
        %v1473 = vrot.slane %v1468, %v1472
        %v1475 = vsub.f32 %v757, %v1473
        %v1476 = vsub.f32 %v760, %v1473
        %v1477 = vsub.f32 %v765, %v1473
        %v1478 = vsub.f32 %v768, %v1473
        %v1479 = vsub.f32 %v773, %v1473
        %v1480 = vsub.f32 %v776, %v1473
        %v1481 = vsub.f32 %v781, %v1473
        %v1482 = vsub.f32 %v784, %v1473
        %v1483 = vsub.f32 %v789, %v1473
        %v1484 = vsub.f32 %v792, %v1473
        %v1485 = vsub.f32 %v797, %v1473
        %v1486 = vsub.f32 %v800, %v1473
        %v1487 = vsub.f32 %v805, %v1473
        %v1488 = vsub.f32 %v808, %v1473
        %v1489 = vsub.f32 %v813, %v1473
        %v1490 = vsub.f32 %v816, %v1473
        %v1491 = vsub.f32 %v821, %v1473
        %v1492 = vsub.f32 %v824, %v1473
        %v1493 = vsub.f32 %v829, %v1473
        %v1494 = vsub.f32 %v832, %v1473
        %v1495 = vsub.f32 %v837, %v1473
        %v1496 = vsub.f32 %v840, %v1473
        %v1497 = vsub.f32 %v845, %v1473
        %v1498 = vsub.f32 %v848, %v1473
        %v1499 = vsub.f32 %v853, %v1473
        %v1500 = vsub.f32 %v856, %v1473
        %v1501 = vsub.f32 %v861, %v1473
        %v1502 = vsub.f32 %v864, %v1473
        %v1503 = vsub.f32 %v869, %v1473
        %v1504 = vsub.f32 %v872, %v1473
        %v1505 = vsub.f32 %v877, %v1473
        %v1506 = vsub.f32 %v880, %v1473
        %v1507 = vsub.f32 %v885, %v1473
        %v1508 = vsub.f32 %v888, %v1473
        %v1509 = vsub.f32 %v893, %v1473
        %v1510 = vsub.f32 %v896, %v1473
        %v1511 = vsub.f32 %v901, %v1473
        %v1512 = vsub.f32 %v904, %v1473
        %v1513 = vsub.f32 %v909, %v1473
        %v1514 = vsub.f32 %v912, %v1473
        %v1515 = vsub.f32 %v917, %v1473
        %v1516 = vsub.f32 %v920, %v1473
        %v1517 = vsub.f32 %v925, %v1473
        %v1518 = vsub.f32 %v928, %v1473
        %v1519 = vsub.f32 %v933, %v1473
        %v1520 = vsub.f32 %v936, %v1473
        %v1521 = vsub.f32 %v941, %v1473
        %v1522 = vsub.f32 %v944, %v1473
        %v1523 = vsub.f32 %v949, %v1473
        %v1524 = vsub.f32 %v952, %v1473
        %v1525 = vsub.f32 %v957, %v1473
        %v1526 = vsub.f32 %v960, %v1473
        %v1527 = vsub.f32 %v965, %v1473
        %v1528 = vsub.f32 %v968, %v1473
        %v1529 = vsub.f32 %v973, %v1473
        %v1530 = vsub.f32 %v976, %v1473
        %v1531 = vsub.f32 %v981, %v1473
        %v1532 = vsub.f32 %v984, %v1473
        %v1533 = vsub.f32 %v989, %v1473
        %v1534 = vsub.f32 %v992, %v1473
        %v1535 = vsub.f32 %v997, %v1473
        %v1536 = vsub.f32 %v1000, %v1473
        %v1537 = vsub.f32 %v1005, %v1473
        %v1538 = vsub.f32 %v1008, %v1473
        %v1539 = vmul.f32 %v1475, 1.442695
        %v1540 = vpow.pop %v1539
        %v1541 = vmul.f32 %v1476, 1.442695
        %v1542 = vpow.pop %v1541
        %v1543 = vmul.f32 %v1477, 1.442695
        %v1544 = vpow.pop %v1543
        %v1545 = vmul.f32 %v1478, 1.442695
        %v1546 = vpow.pop %v1545
        %v1547 = vmul.f32 %v1479, 1.442695
        %v1548 = vpow.pop %v1547
        %v1549 = vmul.f32 %v1480, 1.442695
        %v1550 = vpow.pop %v1549
        %v1551 = vmul.f32 %v1481, 1.442695
        %v1552 = vpow.pop %v1551
        %v1553 = vmul.f32 %v1482, 1.442695
        %v1554 = vpow.pop %v1553
        %v1555 = vmul.f32 %v1483, 1.442695
        %v1556 = vpow.pop %v1555
        %v1557 = vmul.f32 %v1484, 1.442695
        %v1558 = vpow.pop %v1557
        %v1559 = vmul.f32 %v1485, 1.442695
        %v1560 = vpow.pop %v1559
        %v1561 = vmul.f32 %v1486, 1.442695
        %v1562 = vpow.pop %v1561
        %v1563 = vmul.f32 %v1487, 1.442695
        %v1564 = vpow.pop %v1563
        %v1565 = vmul.f32 %v1488, 1.442695
        %v1566 = vpow.pop %v1565
        %v1567 = vmul.f32 %v1489, 1.442695
        %v1568 = vpow.pop %v1567
        %v1569 = vmul.f32 %v1490, 1.442695
        %v1570 = vpow.pop %v1569
        %v1571 = vmul.f32 %v1491, 1.442695
        %v1572 = vpow.pop %v1571
        %v1573 = vmul.f32 %v1492, 1.442695
        %v1574 = vpow.pop %v1573
        %v1575 = vmul.f32 %v1493, 1.442695
        %v1576 = vpow.pop %v1575
        %v1577 = vmul.f32 %v1494, 1.442695
        %v1578 = vpow.pop %v1577
        %v1579 = vmul.f32 %v1495, 1.442695
        %v1580 = vpow.pop %v1579
        %v1581 = vmul.f32 %v1496, 1.442695
        %v1582 = vpow.pop %v1581
        %v1583 = vmul.f32 %v1497, 1.442695
        %v1584 = vpow.pop %v1583
        %v1585 = vmul.f32 %v1498, 1.442695
        %v1586 = vpow.pop %v1585
        %v1587 = vmul.f32 %v1499, 1.442695
        %v1588 = vpow.pop %v1587
        %v1589 = vmul.f32 %v1500, 1.442695
        %v1590 = vpow.pop %v1589
        %v1591 = vmul.f32 %v1501, 1.442695
        %v1592 = vpow.pop %v1591
        %v1593 = vmul.f32 %v1502, 1.442695
        %v1594 = vpow.pop %v1593
        %v1595 = vmul.f32 %v1503, 1.442695
        %v1596 = vpow.pop %v1595
        %v1597 = vmul.f32 %v1504, 1.442695
        %v1598 = vpow.pop %v1597
        %v1599 = vmul.f32 %v1505, 1.442695
        %v1600 = vpow.pop %v1599
        %v1601 = vmul.f32 %v1506, 1.442695
        %v1602 = vpow.pop %v1601
        %v1603 = vmul.f32 %v1507, 1.442695
        %v1604 = vpow.pop %v1603
        %v1605 = vmul.f32 %v1508, 1.442695
        %v1606 = vpow.pop %v1605
        %v1607 = vmul.f32 %v1509, 1.442695
        %v1608 = vpow.pop %v1607
        %v1609 = vmul.f32 %v1510, 1.442695
        %v1610 = vpow.pop %v1609
        %v1611 = vmul.f32 %v1511, 1.442695
        %v1612 = vpow.pop %v1611
        %v1613 = vmul.f32 %v1512, 1.442695
        %v1614 = vpow.pop %v1613
        %v1615 = vmul.f32 %v1513, 1.442695
        %v1616 = vpow.pop %v1615
        %v1617 = vmul.f32 %v1514, 1.442695
        %v1618 = vpow.pop %v1617
        %v1619 = vmul.f32 %v1515, 1.442695
        %v1620 = vpow.pop %v1619
        %v1621 = vmul.f32 %v1516, 1.442695
        %v1622 = vpow.pop %v1621
        %v1623 = vmul.f32 %v1517, 1.442695
        %v1624 = vpow.pop %v1623
        %v1625 = vmul.f32 %v1518, 1.442695
        %v1626 = vpow.pop %v1625
        %v1627 = vmul.f32 %v1519, 1.442695
        %v1628 = vpow.pop %v1627
        %v1629 = vmul.f32 %v1520, 1.442695
        %v1630 = vpow.pop %v1629
        %v1631 = vmul.f32 %v1521, 1.442695
        %v1632 = vpow.pop %v1631
        %v1633 = vmul.f32 %v1522, 1.442695
        %v1634 = vpow.pop %v1633
        %v1635 = vmul.f32 %v1523, 1.442695
        %v1636 = vpow.pop %v1635
        %v1637 = vmul.f32 %v1524, 1.442695
        %v1638 = vpow.pop %v1637
        %v1639 = vmul.f32 %v1525, 1.442695
        %v1640 = vpow.pop %v1639
        %v1641 = vmul.f32 %v1526, 1.442695
        %v1642 = vpow.pop %v1641
        %v1643 = vmul.f32 %v1527, 1.442695
        %v1644 = vpow.pop %v1643
        %v1645 = vmul.f32 %v1528, 1.442695
        %v1646 = vpow.pop %v1645
        %v1647 = vmul.f32 %v1529, 1.442695
        %v1648 = vpow.pop %v1647
        %v1649 = vmul.f32 %v1530, 1.442695
        %v1650 = vpow.pop %v1649
        %v1651 = vmul.f32 %v1531, 1.442695
        %v1652 = vpow.pop %v1651
        %v1653 = vmul.f32 %v1532, 1.442695
        %v1654 = vpow.pop %v1653
        %v1655 = vmul.f32 %v1533, 1.442695
        %v1656 = vpow.pop %v1655
        %v1657 = vmul.f32 %v1534, 1.442695
        %v1658 = vpow.pop %v1657
        %v1659 = vmul.f32 %v1535, 1.442695
        %v1660 = vpow.pop %v1659
        %v1661 = vmul.f32 %v1536, 1.442695
        %v1662 = vpow.pop %v1661
        %v1663 = vmul.f32 %v1537, 1.442695
        %v1664 = vpow.pop %v1663
        %v1665 = vmul.f32 %v1538, 1.442695
        %v1666 = vpow.pop %v1665
        %v1667 = vsel %vm1270, %v1540, 0.0
        %v1668 = vsel %vm1271, %v1542, 0.0
        %v1669 = vsel %vm1272, %v1544, 0.0
        %v1670 = vsel %vm1273, %v1546, 0.0
        %v1671 = vsel %vm1274, %v1548, 0.0
        %v1672 = vsel %vm1275, %v1550, 0.0
        %v1673 = vsel %vm1276, %v1552, 0.0
        %v1674 = vsel %vm1277, %v1554, 0.0
        %v1675 = vsel %vm1278, %v1556, 0.0
        %v1676 = vsel %vm1279, %v1558, 0.0
        %v1677 = vsel %vm1280, %v1560, 0.0
        %v1678 = vsel %vm1281, %v1562, 0.0
        %v1679 = vsel %vm1282, %v1564, 0.0
        %v1680 = vsel %vm1283, %v1566, 0.0
        %v1681 = vsel %vm1284, %v1568, 0.0
        %v1682 = vsel %vm1285, %v1570, 0.0
        %v1683 = vsel %vm1286, %v1572, 0.0
        %v1684 = vsel %vm1287, %v1574, 0.0
        %v1685 = vsel %vm1288, %v1576, 0.0
        %v1686 = vsel %vm1289, %v1578, 0.0
        %v1687 = vsel %vm1290, %v1580, 0.0
        %v1688 = vsel %vm1291, %v1582, 0.0
        %v1689 = vsel %vm1292, %v1584, 0.0
        %v1690 = vsel %vm1293, %v1586, 0.0
        %v1691 = vsel %vm1294, %v1588, 0.0
        %v1692 = vsel %vm1295, %v1590, 0.0
        %v1693 = vsel %vm1296, %v1592, 0.0
        %v1694 = vsel %vm1297, %v1594, 0.0
        %v1695 = vsel %vm1298, %v1596, 0.0
        %v1696 = vsel %vm1299, %v1598, 0.0
        %v1697 = vsel %vm1300, %v1600, 0.0
        %v1698 = vsel %vm1301, %v1602, 0.0
        %v1699 = vsel %vm1302, %v1604, 0.0
        %v1700 = vsel %vm1303, %v1606, 0.0
        %v1701 = vsel %vm1304, %v1608, 0.0
        %v1702 = vsel %vm1305, %v1610, 0.0
        %v1703 = vsel %vm1306, %v1612, 0.0
        %v1704 = vsel %vm1307, %v1614, 0.0
        %v1705 = vsel %vm1308, %v1616, 0.0
        %v1706 = vsel %vm1309, %v1618, 0.0
        %v1707 = vsel %vm1310, %v1620, 0.0
        %v1708 = vsel %vm1311, %v1622, 0.0
        %v1709 = vsel %vm1312, %v1624, 0.0
        %v1710 = vsel %vm1313, %v1626, 0.0
        %v1711 = vsel %vm1314, %v1628, 0.0
        %v1712 = vsel %vm1315, %v1630, 0.0
        %v1713 = vsel %vm1316, %v1632, 0.0
        %v1714 = vsel %vm1317, %v1634, 0.0
        %v1715 = vsel %vm1318, %v1636, 0.0
        %v1716 = vsel %vm1319, %v1638, 0.0
        %v1717 = vsel %vm1320, %v1640, 0.0
        %v1718 = vsel %vm1321, %v1642, 0.0
        %v1719 = vsel %vm1322, %v1644, 0.0
        %v1720 = vsel %vm1323, %v1646, 0.0
        %v1721 = vsel %vm1324, %v1648, 0.0
        %v1722 = vsel %vm1325, %v1650, 0.0
        %v1723 = vsel %vm1326, %v1652, 0.0
        %v1724 = vsel %vm1327, %v1654, 0.0
        %v1725 = vsel %vm1328, %v1656, 0.0
        %v1726 = vsel %vm1329, %v1658, 0.0
        %v1727 = vsel %vm1330, %v1660, 0.0
        %v1728 = vsel %vm1331, %v1662, 0.0
        %v1729 = vsel %vm1332, %v1664, 0.0
        %v1730 = vsel %vm1333, %v1666, 0.0
        %v1731 = vsel %vm1270, %v1475, 0.0
        %v1732 = vsel %vm1271, %v1476, 0.0
        %v1733 = vsel %vm1272, %v1477, 0.0
        %v1734 = vsel %vm1273, %v1478, 0.0
        %v1735 = vsel %vm1274, %v1479, 0.0
        %v1736 = vsel %vm1275, %v1480, 0.0
        %v1737 = vsel %vm1276, %v1481, 0.0
        %v1738 = vsel %vm1277, %v1482, 0.0
        %v1739 = vsel %vm1278, %v1483, 0.0
        %v1740 = vsel %vm1279, %v1484, 0.0
        %v1741 = vsel %vm1280, %v1485, 0.0
        %v1742 = vsel %vm1281, %v1486, 0.0
        %v1743 = vsel %vm1282, %v1487, 0.0
        %v1744 = vsel %vm1283, %v1488, 0.0
        %v1745 = vsel %vm1284, %v1489, 0.0
        %v1746 = vsel %vm1285, %v1490, 0.0
        %v1747 = vsel %vm1286, %v1491, 0.0
        %v1748 = vsel %vm1287, %v1492, 0.0
        %v1749 = vsel %vm1288, %v1493, 0.0
        %v1750 = vsel %vm1289, %v1494, 0.0
        %v1751 = vsel %vm1290, %v1495, 0.0
        %v1752 = vsel %vm1291, %v1496, 0.0
        %v1753 = vsel %vm1292, %v1497, 0.0
        %v1754 = vsel %vm1293, %v1498, 0.0
        %v1755 = vsel %vm1294, %v1499, 0.0
        %v1756 = vsel %vm1295, %v1500, 0.0
        %v1757 = vsel %vm1296, %v1501, 0.0
        %v1758 = vsel %vm1297, %v1502, 0.0
        %v1759 = vsel %vm1298, %v1503, 0.0
        %v1760 = vsel %vm1299, %v1504, 0.0
        %v1761 = vsel %vm1300, %v1505, 0.0
        %v1762 = vsel %vm1301, %v1506, 0.0
        %v1763 = vsel %vm1302, %v1507, 0.0
        %v1764 = vsel %vm1303, %v1508, 0.0
        %v1765 = vsel %vm1304, %v1509, 0.0
        %v1766 = vsel %vm1305, %v1510, 0.0
        %v1767 = vsel %vm1306, %v1511, 0.0
        %v1768 = vsel %vm1307, %v1512, 0.0
        %v1769 = vsel %vm1308, %v1513, 0.0
        %v1770 = vsel %vm1309, %v1514, 0.0
        %v1771 = vsel %vm1310, %v1515, 0.0
        %v1772 = vsel %vm1311, %v1516, 0.0
        %v1773 = vsel %vm1312, %v1517, 0.0
        %v1774 = vsel %vm1313, %v1518, 0.0
        %v1775 = vsel %vm1314, %v1519, 0.0
        %v1776 = vsel %vm1315, %v1520, 0.0
        %v1777 = vsel %vm1316, %v1521, 0.0
        %v1778 = vsel %vm1317, %v1522, 0.0
        %v1779 = vsel %vm1318, %v1523, 0.0
        %v1780 = vsel %vm1319, %v1524, 0.0
        %v1781 = vsel %vm1320, %v1525, 0.0
        %v1782 = vsel %vm1321, %v1526, 0.0
        %v1783 = vsel %vm1322, %v1527, 0.0
        %v1784 = vsel %vm1323, %v1528, 0.0
        %v1785 = vsel %vm1324, %v1529, 0.0
        %v1786 = vsel %vm1325, %v1530, 0.0
        %v1787 = vsel %vm1326, %v1531, 0.0
        %v1788 = vsel %vm1327, %v1532, 0.0
        %v1789 = vsel %vm1328, %v1533, 0.0
        %v1790 = vsel %vm1329, %v1534, 0.0
        %v1791 = vsel %vm1330, %v1535, 0.0
        %v1792 = vsel %vm1331, %v1536, 0.0
        %v1793 = vsel %vm1332, %v1537, 0.0
        %v1794 = vsel %vm1333, %v1538, 0.0
        %v1795 = vsub.f32 %v1398, %v1468
        %v1796 = vmul.f32 %v1795, 1.442695
        %v1797 = vpow.pop %v1796
        %v1798 = vld [vmem:[#allocation4] sm:$0x1]
        %v1799 = vmul.f32 %v1797, %v1798
        %v1800 = vadd.f32 %v1667, %v1668
        %v1801 = vadd.f32 %v1800, %v1669
        %v1802 = vadd.f32 %v1801, %v1670
        %v1803 = vadd.f32 %v1802, %v1671
        %v1804 = vadd.f32 %v1803, %v1672
        %v1805 = vadd.f32 %v1804, %v1673
        %v1806 = vadd.f32 %v1805, %v1674
        %v1807 = vadd.f32 %v1806, %v1675
        %v1808 = vadd.f32 %v1807, %v1676
        %v1809 = vadd.f32 %v1808, %v1677
        %v1810 = vadd.f32 %v1809, %v1678
        %v1811 = vadd.f32 %v1810, %v1679
        %v1812 = vadd.f32 %v1811, %v1680
        %v1813 = vadd.f32 %v1812, %v1681
        %v1814 = vadd.f32 %v1813, %v1682
        %v1815 = vadd.f32 %v1814, %v1683
        %v1816 = vadd.f32 %v1815, %v1684
        %v1817 = vadd.f32 %v1816, %v1685
        %v1818 = vadd.f32 %v1817, %v1686
        %v1819 = vadd.f32 %v1818, %v1687
        %v1820 = vadd.f32 %v1819, %v1688
        %v1821 = vadd.f32 %v1820, %v1689
        %v1822 = vadd.f32 %v1821, %v1690
        %v1823 = vadd.f32 %v1822, %v1691
        %v1824 = vadd.f32 %v1823, %v1692
        %v1825 = vadd.f32 %v1824, %v1693
        %v1826 = vadd.f32 %v1825, %v1694
        %v1827 = vadd.f32 %v1826, %v1695
        %v1828 = vadd.f32 %v1827, %v1696
        %v1829 = vadd.f32 %v1828, %v1697
        %v1830 = vadd.f32 %v1829, %v1698
        %v1831 = vadd.f32 %v1830, %v1699
        %v1832 = vadd.f32 %v1831, %v1700
        %v1833 = vadd.f32 %v1832, %v1701
        %v1834 = vadd.f32 %v1833, %v1702
        %v1835 = vadd.f32 %v1834, %v1703
        %v1836 = vadd.f32 %v1835, %v1704
        %v1837 = vadd.f32 %v1836, %v1705
        %v1838 = vadd.f32 %v1837, %v1706
        %v1839 = vadd.f32 %v1838, %v1707
        %v1840 = vadd.f32 %v1839, %v1708
        %v1841 = vadd.f32 %v1840, %v1709
        %v1842 = vadd.f32 %v1841, %v1710
        %v1843 = vadd.f32 %v1842, %v1711
        %v1844 = vadd.f32 %v1843, %v1712
        %v1845 = vadd.f32 %v1844, %v1713
        %v1846 = vadd.f32 %v1845, %v1714
        %v1847 = vadd.f32 %v1846, %v1715
        %v1848 = vadd.f32 %v1847, %v1716
        %v1849 = vadd.f32 %v1848, %v1717
        %v1850 = vadd.f32 %v1849, %v1718
        %v1851 = vadd.f32 %v1850, %v1719
        %v1852 = vadd.f32 %v1851, %v1720
        %v1853 = vadd.f32 %v1852, %v1721
        %v1854 = vadd.f32 %v1853, %v1722
        %v1855 = vadd.f32 %v1854, %v1723
        %v1856 = vadd.f32 %v1855, %v1724
        %v1857 = vadd.f32 %v1856, %v1725
        %v1858 = vadd.f32 %v1857, %v1726
        %v1859 = vadd.f32 %v1858, %v1727
        %v1860 = vadd.f32 %v1859, %v1728
        %v1861 = vadd.f32 %v1860, %v1729
        %v1862 = vadd.f32 %v1861, %v1730
        %v1863 = vrot.slane %v1862, 4
        %v1864 = vadd.f32 %v1862, %v1863
        %v1865 = vrot.slane %v1864, 2
        %v1866 = vadd.f32 %v1864, %v1865
        %v1867 = vrot.slane %v1866, 1
        %v1868 = vadd.f32 %v1866, %v1867
        %v1869 = vadd.f32 %v1799, %v1868
        %1870 = vst [vmem:[#allocation4] sm:$0x1] %v1869
        %s1871 = scvt.s32.f32 %s1076
        %v1872 = vld [vmem:[#allocation5] sm:$0x1]
        %v1873 = vsub.f32 %v1468, %v1398
        %v1874 = vstv %s1871
        %v1875 = vmul.f32 %v1874, %v1873
        %v1876 = vsub.f32 %v1872, %v1875
        %v1877 = vadd.f32 %v1731, %v1732
        %v1878 = vadd.f32 %v1877, %v1733
        %v1879 = vadd.f32 %v1878, %v1734
        %v1880 = vadd.f32 %v1879, %v1735
        %v1881 = vadd.f32 %v1880, %v1736
        %v1882 = vadd.f32 %v1881, %v1737
        %v1883 = vadd.f32 %v1882, %v1738
        %v1884 = vadd.f32 %v1883, %v1739
        %v1885 = vadd.f32 %v1884, %v1740
        %v1886 = vadd.f32 %v1885, %v1741
        %v1887 = vadd.f32 %v1886, %v1742
        %v1888 = vadd.f32 %v1887, %v1743
        %v1889 = vadd.f32 %v1888, %v1744
        %v1890 = vadd.f32 %v1889, %v1745
        %v1891 = vadd.f32 %v1890, %v1746
        %v1892 = vadd.f32 %v1891, %v1747
        %v1893 = vadd.f32 %v1892, %v1748
        %v1894 = vadd.f32 %v1893, %v1749
        %v1895 = vadd.f32 %v1894, %v1750
        %v1896 = vadd.f32 %v1895, %v1751
        %v1897 = vadd.f32 %v1896, %v1752
        %v1898 = vadd.f32 %v1897, %v1753
        %v1899 = vadd.f32 %v1898, %v1754
        %v1900 = vadd.f32 %v1899, %v1755
        %v1901 = vadd.f32 %v1900, %v1756
        %v1902 = vadd.f32 %v1901, %v1757
        %v1903 = vadd.f32 %v1902, %v1758
        %v1904 = vadd.f32 %v1903, %v1759
        %v1905 = vadd.f32 %v1904, %v1760
        %v1906 = vadd.f32 %v1905, %v1761
        %v1907 = vadd.f32 %v1906, %v1762
        %v1908 = vadd.f32 %v1907, %v1763
        %v1909 = vadd.f32 %v1908, %v1764
        %v1910 = vadd.f32 %v1909, %v1765
        %v1911 = vadd.f32 %v1910, %v1766
        %v1912 = vadd.f32 %v1911, %v1767
        %v1913 = vadd.f32 %v1912, %v1768
        %v1914 = vadd.f32 %v1913, %v1769
        %v1915 = vadd.f32 %v1914, %v1770
        %v1916 = vadd.f32 %v1915, %v1771
        %v1917 = vadd.f32 %v1916, %v1772
        %v1918 = vadd.f32 %v1917, %v1773
        %v1919 = vadd.f32 %v1918, %v1774
        %v1920 = vadd.f32 %v1919, %v1775
        %v1921 = vadd.f32 %v1920, %v1776
        %v1922 = vadd.f32 %v1921, %v1777
        %v1923 = vadd.f32 %v1922, %v1778
        %v1924 = vadd.f32 %v1923, %v1779
        %v1925 = vadd.f32 %v1924, %v1780
        %v1926 = vadd.f32 %v1925, %v1781
        %v1927 = vadd.f32 %v1926, %v1782
        %v1928 = vadd.f32 %v1927, %v1783
        %v1929 = vadd.f32 %v1928, %v1784
        %v1930 = vadd.f32 %v1929, %v1785
        %v1931 = vadd.f32 %v1930, %v1786
        %v1932 = vadd.f32 %v1931, %v1787
        %v1933 = vadd.f32 %v1932, %v1788
        %v1934 = vadd.f32 %v1933, %v1789
        %v1935 = vadd.f32 %v1934, %v1790
        %v1936 = vadd.f32 %v1935, %v1791
        %v1937 = vadd.f32 %v1936, %v1792
        %v1938 = vadd.f32 %v1937, %v1793
        %v1939 = vadd.f32 %v1938, %v1794
        %v1940 = vrot.slane %v1939, 4
        %v1941 = vadd.f32 %v1939, %v1940
        %v1942 = vrot.slane %v1941, 2
        %v1943 = vadd.f32 %v1941, %v1942
        %v1944 = vrot.slane %v1943, 1
        %v1945 = vadd.f32 %v1943, %v1944
        %v1946 = vadd.f32 %v1876, %v1945
        %1947 = vst [vmem:[#allocation5] sm:$0x1] %v1946
        %1948 = vst [vmem:[#allocation3] sm:$0x1] %v1468
        %p1949 = scmp.eq.s32.totalorder %s21, 1
        // Predicated region
        $region41: #{_masked_energies_padded.1} parent=35 // pred_check
          %p1950 = pneg %p1949
        $region42: #{_masked_energies_padded.1} parent=35 // pred_check_branch
          %1952 = sbr.rel (%p1950) target = $region44
        $region43: #{_masked_energies_padded.1} parent=35 // pred_region
          %v1953 = vld [vmem:[#allocation5] sm:$0x1]
          %v1954 = vld [vmem:[#allocation4] sm:$0x1]
          %v1955 = vlog2.pop %v1954
          %v1956 = vmul.f32 %v1955, 0.6931472
          %v1957 = vmul.f32 %v1956, 1000.0
          %v1958 = vsub.f32 %v1953, %v1957
          %1959 = vst [vmem:[#allocation6] sm:$0x1] %v1958
        $region44: #{_masked_energies_padded.1} parent=35 // pred_fallthru
          _
        // Predicated region
        $region45: #{_masked_energies_padded.1} parent=35 // pred_check
          %p1960 = pneg %p145
        $region46: #{_masked_energies_padded.1} parent=35 // pred_check_branch
          %1962 = sbr.rel (%p1960) target = $region48
        $region47: #{_masked_energies_padded.1} parent=35 // pred_region
          %s1964 = ssub.s32 16, 16
          %1965 = vsyncadd [#allocation7], %s1964
          %s1966 = smul.addr %s20, 16
          %s1967 = scalar_lea.hbm %s4, %s1966
          %s1969 = sshll.u32 [#allocation6], 4
          %s1970 = int_to_ptr.vmem [resolvable:$true] %s1969
          %1972 = dma.vmem_to_hbm [thread:$0]  %s1970, 16, %s1967, [#allocation7]
        $region48: #{_masked_energies_padded.1} parent=35 // pred_fallthru
          _
        // Predicated region
        $region49: #{_masked_energies_padded.1} parent=35 // pred_check
          %p1973 = pneg %p145
        $region50: #{_masked_energies_padded.1} parent=35 // pred_check_branch
          %1975 = sbr.rel (%p1973) target = $region52
        $region51: #{_masked_energies_padded.1} parent=35 // pred_region
          %1976 = dma.done [#allocation7], 16
        $region52: #{_masked_energies_padded.1} parent=35 // pred_fallthru
          _
      $region36: #{_masked_energies_padded.1} parent=5 // pred_fallthru
        _
      %p1977 = scmp.le.s32.totalorder 2, %s11
      // Predicated region
      $region53: #{_masked_energies_padded.1} parent=5 // pred_check
        %p1978 = pneg %p1977
      $region54: #{_masked_energies_padded.1} parent=5 // pred_check_branch
        %1980 = sbr.rel (%p1978) target = $region56
      $region55: #{_masked_energies_padded.1} parent=5 // pred_region
        %s1981 = ssub.s32 %s11, 2
      $region56: #{_masked_energies_padded.1} parent=5 // pred_fallthru
        _
    $region6: #{_masked_energies_padded.1} parent=1 // loop_footer
      %s15 = sadd.s32 1, %s11
    $region7: #{_masked_energies_padded.1} parent=1 // loop_footer_branch
      %10 = sbr.rel target = $region3
    $region8: #{_masked_energies_padded.1} parent=1 // loop_exit
      _
    %1982 = vsyncpa [#allocation7], 1
    %s1983 = scalar_lea.sflag [#allocation7], 1
    %1984 = vsyncpa %s1983, 1

</llo_original>
